<compile_context>
chip_gen: v7x
topology: tpu7x:2x2x1
jax: 0.10.0
libtpu: 0.0.40
codegen_flags: <defaults>
</compile_context>

<pallas_src>
import jax
import jax.numpy as jnp
from jax import lax
from jax.experimental import pallas as pl
from jax.experimental.pallas import tpu as pltpu

# ---------------- synthetic hyperparameters (hp / dp) ----------------
CONV_IN_CH = 1          # hp.conv2d_in_channels
CONV_OUT_CH = 4         # hp.conv2d_out_channels
KH, KW = 3, 3           # hp.conv2d_kernel_size
SH, SW = 1, 1           # hp.conv2d_strides  (kernel assumes stride 1)
MEL_N_CHANNELS = 16     # dp.mel_n_channels
T_FRAMES = 10           # input time frames
HIDDEN = 32             # hp.recurrent_hidden_size
FC_SIZE = 16            # hp.fully_connected_size
BN_EPS = 1e-5
BATCH = 2
N_ENROLL = 3

assert SH == 1 and SW == 1, "fused kernel written for stride-1 conv"

T_OUT = (T_FRAMES - KH) // SH + 1              # 8
W_OUT = (MEL_N_CHANNELS - KW) // SW + 1        # 14
GRU_IN = W_OUT * CONV_OUT_CH                   # 56
NB_TOTAL = N_ENROLL * BATCH + BATCH            # 8: all enrollments + test in one batch
N_TAPS = CONV_OUT_CH * CONV_IN_CH * KH * KW    # 36 folded conv weights (SMEM scalars)
SCORE_W_IDX = N_TAPS                           # index of score weight in SMEM scalar array
SCORE_B_IDX = N_TAPS + 1                       # index of score bias


# ================================ fused Pallas kernel ================================
def _verifier_kernel(scal_ref, mel_ref, bvec_ref, wih_ref, bih_ref,
                     whh_ref, bhh_ref, wl_ref, bl_ref, s_ref, o_ref):
    """conv+BN+ReLU -> GRU -> mean(time) -> Linear -> similarity score, all in VMEM."""
    mel = mel_ref[...]                                       # (T_FRAMES*NB, CIN*MEL)

    # ---- Conv2d (+ folded BatchNorm scale) as shifted VPU multiply-accumulates.
    #      Result lands directly in (T_OUT*NB, Cout*W_OUT) = GRU-input layout.
    accs = [None] * CONV_OUT_CH
    for ci in range(CONV_IN_CH):
        for kh in range(KH):
            for kw in range(KW):
                patch = mel[kh * NB_TOTAL: kh * NB_TOTAL + T_OUT * NB_TOTAL,
                            ci * MEL_N_CHANNELS + kw:
                            ci * MEL_N_CHANNELS + kw + W_OUT]        # (T_OUT*NB, W_OUT)
                for c in range(CONV_OUT_CH):
                    w = scal_ref[((c * CONV_IN_CH + ci) * KH + kh) * KW + kw]  # SMEM scalar
                    term = w * patch
                    accs[c] = term if accs[c] is None else accs[c] + term
    x = jnp.concatenate(accs, axis=-1)                       # (T_OUT*NB, GRU_IN), c*W_OUT+w order
    x = jnp.maximum(x + bvec_ref[...], 0.0)                  # folded conv bias + BN shift, ReLU
    # TODO(synk): Dropout is identity (eval semantics).

    # ---- GRU: input projection hoisted out of the recurrence (one matmul, all timesteps).
    gi_all = jnp.dot(x, wih_ref[...], preferred_element_type=jnp.float32) + bih_ref[...]
    w_hh = whh_ref[...]
    b_hh = bhh_ref[...]
    H = HIDDEN
    h = jnp.zeros((NB_TOTAL, H), jnp.float32)
    acc_h = jnp.zeros((NB_TOTAL, H), jnp.float32)
    for t in range(T_OUT):                                   # fully unrolled (T_OUT = 8, static)
        gi = gi_all[t * NB_TOTAL:(t + 1) * NB_TOTAL, :]      # 8-sublane-aligned static slice
        gh = jnp.dot(h, w_hh, preferred_element_type=jnp.float32) + b_hh
        r = jax.nn.sigmoid(gi[:, :H] + gh[:, :H])
        z = jax.nn.sigmoid(gi[:, H:2 * H] + gh[:, H:2 * H])
        n = jnp.tanh(gi[:, 2 * H:] + r * gh[:, 2 * H:])
        h = (1.0 - z) * n + z * h
        acc_h = acc_h + h
    mean_h = acc_h * (1.0 / T_OUT)

    # ---- Linear -> embeddings for all NB samples (enrollments first, then test).
    emb = jnp.dot(mean_h, wl_ref[...], preferred_element_type=jnp.float32) + bl_ref[...]

    # ---- Similarity score: mean enrollment embedding vs. test embedding.
    e_emb = emb[0:BATCH, :]
    for e in range(1, N_ENROLL):
        e_emb = e_emb + emb[e * BATCH:(e + 1) * BATCH, :]
    e_emb = e_emb * (1.0 / N_ENROLL)
    t_emb = emb[N_ENROLL * BATCH: N_ENROLL * BATCH + BATCH, :]
    s_sym = s_ref[...]                                       # pre-symmetrized on host
    es = jnp.dot(e_emb, s_sym, preferred_element_type=jnp.float32)
    ts = jnp.dot(t_emb, s_sym, preferred_element_type=jnp.float32)
    w_sc = scal_ref[SCORE_W_IDX]
    b_sc = scal_ref[SCORE_B_IDX]
    o_ref[...] = (w_sc * jnp.sum(e_emb * t_emb, axis=1, keepdims=True)
                  - jnp.sum(e_emb * es, axis=1, keepdims=True)
                  - jnp.sum(t_emb * ts, axis=1, keepdims=True)
                  + b_sc)


def _verifier_pallas(scalars, mel2d, bvec, w_ih, b_ih, w_hh, b_hh, lin_w, lin_b, s_sym):
    vmem = pl.BlockSpec(memory_space=pltpu.MemorySpace.VMEM)
    smem = pl.BlockSpec(memory_space=pltpu.MemorySpace.SMEM)
    return pl.pallas_call(
        _verifier_kernel,
        out_shape=jax.ShapeDtypeStruct((BATCH, 1), jnp.float32),
        in_specs=[smem] + [vmem] * 9,
        out_specs=vmem,
    )(scalars, mel2d, bvec, w_ih, b_ih, w_hh, b_hh, lin_w, lin_b, s_sym)


# ================================ host-side glue (plain JAX, jitted) ================================
@jax.jit
def speaker_verifier_forward(enrollment_mels, test_mel, p):
    # Batch every sample (all enrollments + test) into one kernel invocation.
    E, N = enrollment_mels.shape[0], enrollment_mels.shape[1]
    mel_all = jnp.concatenate(
        [enrollment_mels.reshape((E * N,) + enrollment_mels.shape[2:]), test_mel], axis=0)
    nb = mel_all.shape[0]                                    # == NB_TOTAL
    # (NB, CIN, T, MEL) -> time-major 2-D (T*NB, CIN*MEL) so the kernel's conv taps are
    # contiguous, 8-aligned row slices and the conv output is already GRU time-major.
    mel2d = mel_all.transpose(2, 0, 1, 3).reshape(T_FRAMES * nb,
                                                  CONV_IN_CH * MEL_N_CHANNELS)

    # Fold eval-mode BatchNorm into the conv weights / bias (BN becomes free).
    inv_std = 1.0 / jnp.sqrt(p['bn_var'] + BN_EPS)
    scale = p['bn_gamma'] * inv_std                                  # (Cout,)
    w_fold = p['conv_w'] * scale[:, None, None, None]                # (Cout, Cin, KH, KW)
    b_fold = (p['conv_b'] - p['bn_mean']) * scale + p['bn_beta']     # (Cout,)
    bvec = jnp.repeat(b_fold, W_OUT)[None, :]                        # (1, GRU_IN), c*W_OUT+w order

    # SMEM scalar pack: [36 folded conv taps | score_w | score_b].
    scalars = jnp.concatenate([w_fold.reshape(-1),
                               p['score_w'].reshape(-1),
                               p['score_b'].reshape(-1)])
    # Symmetrize the similarity matrix once on the host.
    s_sym = 0.5 * (p['half_sim'] + p['half_sim'].T)

    return _verifier_pallas(scalars, mel2d, bvec,
                            p['w_ih'], p['b_ih'][None, :],
                            p['w_hh'], p['b_hh'][None, :],
                            p['lin_w'], p['lin_b'][None, :], s_sym)


# ================================ deterministic params ================================
def init_params(key):
    ks = jax.random.split(key, 12)
    s = 1.0 / jnp.sqrt(jnp.float32(HIDDEN))
    # Note: w_ih / w_hh are stored pre-transposed as (D, 3H) / (H, 3H) with PyTorch
    # gate order (r, z, n); loading real nn.GRU weights (3H, D) would need a transpose.
    return dict(
        conv_w=jax.random.normal(ks[0], (CONV_OUT_CH, CONV_IN_CH, KH, KW), jnp.float32) * 0.3,
        conv_b=jax.random.normal(ks[1], (CONV_OUT_CH,), jnp.float32) * 0.05,
        bn_gamma=1.0 + 0.1 * jax.random.normal(ks[2], (CONV_OUT_CH,), jnp.float32),
        bn_beta=0.05 * jax.random.normal(ks[3], (CONV_OUT_CH,), jnp.float32),
        bn_mean=jnp.zeros((CONV_OUT_CH,), jnp.float32),
        bn_var=jnp.ones((CONV_OUT_CH,), jnp.float32),
        w_ih=jax.random.uniform(ks[4], (GRU_IN, 3 * HIDDEN), jnp.float32, -s, s),
        w_hh=jax.random.uniform(ks[5], (HIDDEN, 3 * HIDDEN), jnp.float32, -s, s),
        b_ih=jax.random.uniform(ks[6], (3 * HIDDEN,), jnp.float32, -s, s),
        b_hh=jax.random.uniform(ks[7], (3 * HIDDEN,), jnp.float32, -s, s),
        lin_w=jax.random.normal(ks[8], (HIDDEN, FC_SIZE), jnp.float32) * 0.2,
        lin_b=jax.random.normal(ks[9], (FC_SIZE,), jnp.float32) * 0.05,
        half_sim=jax.random.normal(ks[10], (FC_SIZE, FC_SIZE), jnp.float32) * 0.2,
        score_w=jnp.array([[10.0]], jnp.float32),
        score_b=jnp.array([[-5.0]], jnp.float32),
    )


# ================================ pure-JAX reference ================================
def _ref_embedding(mel, p):
    y = lax.conv_general_dilated(mel, p['conv_w'], (SH, SW), 'VALID',
                                 dimension_numbers=('NCHW', 'OIHW', 'NCHW'))
    y = y + p['conv_b'][None, :, None, None]
    inv_std = 1.0 / jnp.sqrt(p['bn_var'] + BN_EPS)
    y = ((y - p['bn_mean'][None, :, None, None])
         * (p['bn_gamma'] * inv_std)[None, :, None, None]
         + p['bn_beta'][None, :, None, None])
    y = jnp.maximum(y, 0.0)
    y = y.transpose(0, 2, 1, 3).reshape(mel.shape[0], T_OUT, -1)
    H = HIDDEN

    def gru_step(h, xt):
        gi = xt @ p['w_ih'] + p['b_ih']
        gh = h @ p['w_hh'] + p['b_hh']
        r = jax.nn.sigmoid(gi[:, :H] + gh[:, :H])
        z = jax.nn.sigmoid(gi[:, H:2 * H] + gh[:, H:2 * H])
        n = jnp.tanh(gi[:, 2 * H:] + r * gh[:, 2 * H:])
        h_new = (1.0 - z) * n + z * h
        return h_new, h_new

    h0 = jnp.zeros((mel.shape[0], H), jnp.float32)
    _, hs = lax.scan(gru_step, h0, y.transpose(1, 0, 2))
    return jnp.mean(hs, axis=0) @ p['lin_w'] + p['lin_b']


def _ref_forward(enrollment_mels, test_mel, p):
    e_emb = jnp.mean(jnp.stack([_ref_embedding(enrollment_mels[i], p)
                                for i in range(enrollment_mels.shape[0])], axis=2), axis=2)
    t_emb = _ref_embedding(test_mel, p)
    s = 0.5 * (p['half_sim'] + p['half_sim'].T)
    bdot = lambda a, b: jnp.sum(a * b, axis=1, keepdims=True)
    return (p['score_w'][0, 0] * bdot(e_emb, t_emb)
            - bdot(e_emb, e_emb @ s) - bdot(t_emb, t_emb @ s) + p['score_b'][0, 0])


# ================================ main ================================
if __name__ == "__main__":
    key = jax.random.PRNGKey(0)
    kp, ke, kt = jax.random.split(key, 3)
    params = init_params(kp)

    enrollment_mels = jax.random.normal(
        ke, (N_ENROLL, BATCH, CONV_IN_CH, T_FRAMES, MEL_N_CHANNELS), jnp.float32)
    test_mel = jax.random.normal(
        kt, (BATCH, CONV_IN_CH, T_FRAMES, MEL_N_CHANNELS), jnp.float32)

    score = speaker_verifier_forward(enrollment_mels, test_mel, params)
    score = jax.block_until_ready(score)
    assert score.shape == (BATCH, 1)

    ref = _ref_forward(enrollment_mels, test_mel, params)
    if not jnp.allclose(score, ref, rtol=1e-2, atol=1e-2):
        raise AssertionError(f"mismatch: pallas={score} ref={ref}")

    print("KERNEL_OK")
</pallas_src>

<mosaic_0001>
module attributes {stable_mosaic.version = 11 : i64} {
  func.func @_verifier_kernel(%arg0: memref<38xf32, #tpu.memory_space<smem>>, %arg1: memref<80x16xf32, #tpu.memory_space<vmem>>, %arg2: memref<1x56xf32, #tpu.memory_space<vmem>>, %arg3: memref<56x96xf32, #tpu.memory_space<vmem>>, %arg4: memref<1x96xf32, #tpu.memory_space<vmem>>, %arg5: memref<32x96xf32, #tpu.memory_space<vmem>>, %arg6: memref<1x96xf32, #tpu.memory_space<vmem>>, %arg7: memref<32x16xf32, #tpu.memory_space<vmem>>, %arg8: memref<1x16xf32, #tpu.memory_space<vmem>>, %arg9: memref<16x16xf32, #tpu.memory_space<vmem>>, %arg10: memref<2x1xf32, #tpu.memory_space<vmem>>) attributes {dimension_semantics = [], scalar_prefetch = 0 : i64, scratch_operands = 0 : i64, tpu.core_type = #tpu.core_type<tc>} {
    %c0 = arith.constant 0 : index
    %c0_0 = arith.constant 0 : index
    %0 = vector.load %arg1[%c0, %c0_0] : memref<80x16xf32, #tpu.memory_space<vmem>>, vector<80x16xf32>
    %1 = vector.extract_strided_slice %0 {offsets = [0, 0], sizes = [64, 14], strides = [1, 1]} : vector<80x16xf32> to vector<64x14xf32>
    %c0_1 = arith.constant 0 : index
    %2 = memref.load %arg0[%c0_1] : memref<38xf32, #tpu.memory_space<smem>>
    %3 = vector.broadcast %2 : f32 to vector<64x14xf32>
    %4 = arith.mulf %3, %1 : vector<64x14xf32>
    %c9 = arith.constant 9 : index
    %5 = memref.load %arg0[%c9] : memref<38xf32, #tpu.memory_space<smem>>
    %6 = vector.broadcast %5 : f32 to vector<64x14xf32>
    %7 = arith.mulf %6, %1 : vector<64x14xf32>
    %c18 = arith.constant 18 : index
    %8 = memref.load %arg0[%c18] : memref<38xf32, #tpu.memory_space<smem>>
    %9 = vector.broadcast %8 : f32 to vector<64x14xf32>
    %10 = arith.mulf %9, %1 : vector<64x14xf32>
    %c27 = arith.constant 27 : index
    %11 = memref.load %arg0[%c27] : memref<38xf32, #tpu.memory_space<smem>>
    %12 = vector.broadcast %11 : f32 to vector<64x14xf32>
    %13 = arith.mulf %12, %1 : vector<64x14xf32>
    %14 = vector.extract_strided_slice %0 {offsets = [0, 1], sizes = [64, 14], strides = [1, 1]} : vector<80x16xf32> to vector<64x14xf32>
    %c1 = arith.constant 1 : index
    %15 = memref.load %arg0[%c1] : memref<38xf32, #tpu.memory_space<smem>>
    %16 = vector.broadcast %15 : f32 to vector<64x14xf32>
    %17 = arith.mulf %16, %14 : vector<64x14xf32>
    %18 = arith.addf %4, %17 : vector<64x14xf32>
    %c10 = arith.constant 10 : index
    %19 = memref.load %arg0[%c10] : memref<38xf32, #tpu.memory_space<smem>>
    %20 = vector.broadcast %19 : f32 to vector<64x14xf32>
    %21 = arith.mulf %20, %14 : vector<64x14xf32>
    %22 = arith.addf %7, %21 : vector<64x14xf32>
    %c19 = arith.constant 19 : index
    %23 = memref.load %arg0[%c19] : memref<38xf32, #tpu.memory_space<smem>>
    %24 = vector.broadcast %23 : f32 to vector<64x14xf32>
    %25 = arith.mulf %24, %14 : vector<64x14xf32>
    %26 = arith.addf %10, %25 : vector<64x14xf32>
    %c28 = arith.constant 28 : index
    %27 = memref.load %arg0[%c28] : memref<38xf32, #tpu.memory_space<smem>>
    %28 = vector.broadcast %27 : f32 to vector<64x14xf32>
    %29 = arith.mulf %28, %14 : vector<64x14xf32>
    %30 = arith.addf %13, %29 : vector<64x14xf32>
    %31 = vector.extract_strided_slice %0 {offsets = [0, 2], sizes = [64, 14], strides = [1, 1]} : vector<80x16xf32> to vector<64x14xf32>
    %c2 = arith.constant 2 : index
    %32 = memref.load %arg0[%c2] : memref<38xf32, #tpu.memory_space<smem>>
    %33 = vector.broadcast %32 : f32 to vector<64x14xf32>
    %34 = arith.mulf %33, %31 : vector<64x14xf32>
    %35 = arith.addf %18, %34 : vector<64x14xf32>
    %c11 = arith.constant 11 : index
    %36 = memref.load %arg0[%c11] : memref<38xf32, #tpu.memory_space<smem>>
    %37 = vector.broadcast %36 : f32 to vector<64x14xf32>
    %38 = arith.mulf %37, %31 : vector<64x14xf32>
    %39 = arith.addf %22, %38 : vector<64x14xf32>
    %c20 = arith.constant 20 : index
    %40 = memref.load %arg0[%c20] : memref<38xf32, #tpu.memory_space<smem>>
    %41 = vector.broadcast %40 : f32 to vector<64x14xf32>
    %42 = arith.mulf %41, %31 : vector<64x14xf32>
    %43 = arith.addf %26, %42 : vector<64x14xf32>
    %c29 = arith.constant 29 : index
    %44 = memref.load %arg0[%c29] : memref<38xf32, #tpu.memory_space<smem>>
    %45 = vector.broadcast %44 : f32 to vector<64x14xf32>
    %46 = arith.mulf %45, %31 : vector<64x14xf32>
    %47 = arith.addf %30, %46 : vector<64x14xf32>
    %48 = vector.extract_strided_slice %0 {offsets = [8, 0], sizes = [64, 14], strides = [1, 1]} : vector<80x16xf32> to vector<64x14xf32>
    %c3 = arith.constant 3 : index
    %49 = memref.load %arg0[%c3] : memref<38xf32, #tpu.memory_space<smem>>
    %50 = vector.broadcast %49 : f32 to vector<64x14xf32>
    %51 = arith.mulf %50, %48 : vector<64x14xf32>
    %52 = arith.addf %35, %51 : vector<64x14xf32>
    %c12 = arith.constant 12 : index
    %53 = memref.load %arg0[%c12] : memref<38xf32, #tpu.memory_space<smem>>
    %54 = vector.broadcast %53 : f32 to vector<64x14xf32>
    %55 = arith.mulf %54, %48 : vector<64x14xf32>
    %56 = arith.addf %39, %55 : vector<64x14xf32>
    %c21 = arith.constant 21 : index
    %57 = memref.load %arg0[%c21] : memref<38xf32, #tpu.memory_space<smem>>
    %58 = vector.broadcast %57 : f32 to vector<64x14xf32>
    %59 = arith.mulf %58, %48 : vector<64x14xf32>
    %60 = arith.addf %43, %59 : vector<64x14xf32>
    %c30 = arith.constant 30 : index
    %61 = memref.load %arg0[%c30] : memref<38xf32, #tpu.memory_space<smem>>
    %62 = vector.broadcast %61 : f32 to vector<64x14xf32>
    %63 = arith.mulf %62, %48 : vector<64x14xf32>
    %64 = arith.addf %47, %63 : vector<64x14xf32>
    %65 = vector.extract_strided_slice %0 {offsets = [8, 1], sizes = [64, 14], strides = [1, 1]} : vector<80x16xf32> to vector<64x14xf32>
    %c4 = arith.constant 4 : index
    %66 = memref.load %arg0[%c4] : memref<38xf32, #tpu.memory_space<smem>>
    %67 = vector.broadcast %66 : f32 to vector<64x14xf32>
    %68 = arith.mulf %67, %65 : vector<64x14xf32>
    %69 = arith.addf %52, %68 : vector<64x14xf32>
    %c13 = arith.constant 13 : index
    %70 = memref.load %arg0[%c13] : memref<38xf32, #tpu.memory_space<smem>>
    %71 = vector.broadcast %70 : f32 to vector<64x14xf32>
    %72 = arith.mulf %71, %65 : vector<64x14xf32>
    %73 = arith.addf %56, %72 : vector<64x14xf32>
    %c22 = arith.constant 22 : index
    %74 = memref.load %arg0[%c22] : memref<38xf32, #tpu.memory_space<smem>>
    %75 = vector.broadcast %74 : f32 to vector<64x14xf32>
    %76 = arith.mulf %75, %65 : vector<64x14xf32>
    %77 = arith.addf %60, %76 : vector<64x14xf32>
    %c31 = arith.constant 31 : index
    %78 = memref.load %arg0[%c31] : memref<38xf32, #tpu.memory_space<smem>>
    %79 = vector.broadcast %78 : f32 to vector<64x14xf32>
    %80 = arith.mulf %79, %65 : vector<64x14xf32>
    %81 = arith.addf %64, %80 : vector<64x14xf32>
    %82 = vector.extract_strided_slice %0 {offsets = [8, 2], sizes = [64, 14], strides = [1, 1]} : vector<80x16xf32> to vector<64x14xf32>
    %c5 = arith.constant 5 : index
    %83 = memref.load %arg0[%c5] : memref<38xf32, #tpu.memory_space<smem>>
    %84 = vector.broadcast %83 : f32 to vector<64x14xf32>
    %85 = arith.mulf %84, %82 : vector<64x14xf32>
    %86 = arith.addf %69, %85 : vector<64x14xf32>
    %c14 = arith.constant 14 : index
    %87 = memref.load %arg0[%c14] : memref<38xf32, #tpu.memory_space<smem>>
    %88 = vector.broadcast %87 : f32 to vector<64x14xf32>
    %89 = arith.mulf %88, %82 : vector<64x14xf32>
    %90 = arith.addf %73, %89 : vector<64x14xf32>
    %c23 = arith.constant 23 : index
    %91 = memref.load %arg0[%c23] : memref<38xf32, #tpu.memory_space<smem>>
    %92 = vector.broadcast %91 : f32 to vector<64x14xf32>
    %93 = arith.mulf %92, %82 : vector<64x14xf32>
    %94 = arith.addf %77, %93 : vector<64x14xf32>
    %c32 = arith.constant 32 : index
    %95 = memref.load %arg0[%c32] : memref<38xf32, #tpu.memory_space<smem>>
    %96 = vector.broadcast %95 : f32 to vector<64x14xf32>
    %97 = arith.mulf %96, %82 : vector<64x14xf32>
    %98 = arith.addf %81, %97 : vector<64x14xf32>
    %99 = vector.extract_strided_slice %0 {offsets = [16, 0], sizes = [64, 14], strides = [1, 1]} : vector<80x16xf32> to vector<64x14xf32>
    %c6 = arith.constant 6 : index
    %100 = memref.load %arg0[%c6] : memref<38xf32, #tpu.memory_space<smem>>
    %101 = vector.broadcast %100 : f32 to vector<64x14xf32>
    %102 = arith.mulf %101, %99 : vector<64x14xf32>
    %103 = arith.addf %86, %102 : vector<64x14xf32>
    %c15 = arith.constant 15 : index
    %104 = memref.load %arg0[%c15] : memref<38xf32, #tpu.memory_space<smem>>
    %105 = vector.broadcast %104 : f32 to vector<64x14xf32>
    %106 = arith.mulf %105, %99 : vector<64x14xf32>
    %107 = arith.addf %90, %106 : vector<64x14xf32>
    %c24 = arith.constant 24 : index
    %108 = memref.load %arg0[%c24] : memref<38xf32, #tpu.memory_space<smem>>
    %109 = vector.broadcast %108 : f32 to vector<64x14xf32>
    %110 = arith.mulf %109, %99 : vector<64x14xf32>
    %111 = arith.addf %94, %110 : vector<64x14xf32>
    %c33 = arith.constant 33 : index
    %112 = memref.load %arg0[%c33] : memref<38xf32, #tpu.memory_space<smem>>
    %113 = vector.broadcast %112 : f32 to vector<64x14xf32>
    %114 = arith.mulf %113, %99 : vector<64x14xf32>
    %115 = arith.addf %98, %114 : vector<64x14xf32>
    %116 = vector.extract_strided_slice %0 {offsets = [16, 1], sizes = [64, 14], strides = [1, 1]} : vector<80x16xf32> to vector<64x14xf32>
    %c7 = arith.constant 7 : index
    %117 = memref.load %arg0[%c7] : memref<38xf32, #tpu.memory_space<smem>>
    %118 = vector.broadcast %117 : f32 to vector<64x14xf32>
    %119 = arith.mulf %118, %116 : vector<64x14xf32>
    %120 = arith.addf %103, %119 : vector<64x14xf32>
    %c16 = arith.constant 16 : index
    %121 = memref.load %arg0[%c16] : memref<38xf32, #tpu.memory_space<smem>>
    %122 = vector.broadcast %121 : f32 to vector<64x14xf32>
    %123 = arith.mulf %122, %116 : vector<64x14xf32>
    %124 = arith.addf %107, %123 : vector<64x14xf32>
    %c25 = arith.constant 25 : index
    %125 = memref.load %arg0[%c25] : memref<38xf32, #tpu.memory_space<smem>>
    %126 = vector.broadcast %125 : f32 to vector<64x14xf32>
    %127 = arith.mulf %126, %116 : vector<64x14xf32>
    %128 = arith.addf %111, %127 : vector<64x14xf32>
    %c34 = arith.constant 34 : index
    %129 = memref.load %arg0[%c34] : memref<38xf32, #tpu.memory_space<smem>>
    %130 = vector.broadcast %129 : f32 to vector<64x14xf32>
    %131 = arith.mulf %130, %116 : vector<64x14xf32>
    %132 = arith.addf %115, %131 : vector<64x14xf32>
    %133 = vector.extract_strided_slice %0 {offsets = [16, 2], sizes = [64, 14], strides = [1, 1]} : vector<80x16xf32> to vector<64x14xf32>
    %c8 = arith.constant 8 : index
    %134 = memref.load %arg0[%c8] : memref<38xf32, #tpu.memory_space<smem>>
    %135 = vector.broadcast %134 : f32 to vector<64x14xf32>
    %136 = arith.mulf %135, %133 : vector<64x14xf32>
    %137 = arith.addf %120, %136 : vector<64x14xf32>
    %c17 = arith.constant 17 : index
    %138 = memref.load %arg0[%c17] : memref<38xf32, #tpu.memory_space<smem>>
    %139 = vector.broadcast %138 : f32 to vector<64x14xf32>
    %140 = arith.mulf %139, %133 : vector<64x14xf32>
    %141 = arith.addf %124, %140 : vector<64x14xf32>
    %c26 = arith.constant 26 : index
    %142 = memref.load %arg0[%c26] : memref<38xf32, #tpu.memory_space<smem>>
    %143 = vector.broadcast %142 : f32 to vector<64x14xf32>
    %144 = arith.mulf %143, %133 : vector<64x14xf32>
    %145 = arith.addf %128, %144 : vector<64x14xf32>
    %c35 = arith.constant 35 : index
    %146 = memref.load %arg0[%c35] : memref<38xf32, #tpu.memory_space<smem>>
    %147 = vector.broadcast %146 : f32 to vector<64x14xf32>
    %148 = arith.mulf %147, %133 : vector<64x14xf32>
    %149 = arith.addf %132, %148 : vector<64x14xf32>
    %150 = tpu.concatenate %137, %141, %145, %149 in 1 : vector<64x14xf32>, vector<64x14xf32>, vector<64x14xf32>, vector<64x14xf32> -> vector<64x56xf32>
    %c0_2 = arith.constant 0 : index
    %c0_3 = arith.constant 0 : index
    %151 = vector.load %arg2[%c0_2, %c0_3] : memref<1x56xf32, #tpu.memory_space<vmem>>, vector<1x56xf32>
    %152 = vector.broadcast %151 : vector<1x56xf32> to vector<64x56xf32>
    %153 = arith.addf %150, %152 : vector<64x56xf32>
    %cst = arith.constant 0.000000e+00 : f32
    %154 = vector.broadcast %cst : f32 to vector<64x56xf32>
    %155 = arith.maximumf %153, %154 : vector<64x56xf32>
    %c0_4 = arith.constant 0 : index
    %c0_5 = arith.constant 0 : index
    %156 = vector.load %arg3[%c0_4, %c0_5] : memref<56x96xf32, #tpu.memory_space<vmem>>, vector<56x96xf32>
    %cst_6 = arith.constant dense<0.000000e+00> : vector<64x96xf32>
    %157 = tpu.matmul %155, %156, %cst_6 {dimension_numbers = #tpu.dot_dimension_numbers<[1], [0], [0], [1], [0, 0, 1, 1], [], []>} : vector<64x56xf32>, vector<56x96xf32>, vector<64x96xf32> -> vector<64x96xf32>
    %c0_7 = arith.constant 0 : index
    %c0_8 = arith.constant 0 : index
    %158 = vector.load %arg4[%c0_7, %c0_8] : memref<1x96xf32, #tpu.memory_space<vmem>>, vector<1x96xf32>
    %159 = vector.broadcast %158 : vector<1x96xf32> to vector<64x96xf32>
    %160 = arith.addf %157, %159 : vector<64x96xf32>
    %c0_9 = arith.constant 0 : index
    %c0_10 = arith.constant 0 : index
    %161 = vector.load %arg5[%c0_9, %c0_10] : memref<32x96xf32, #tpu.memory_space<vmem>>, vector<32x96xf32>
    %c0_11 = arith.constant 0 : index
    %c0_12 = arith.constant 0 : index
    %162 = vector.load %arg6[%c0_11, %c0_12] : memref<1x96xf32, #tpu.memory_space<vmem>>, vector<1x96xf32>
    %cst_13 = arith.constant 0.000000e+00 : f32
    %163 = vector.broadcast %cst_13 : f32 to vector<8x32xf32>
    %cst_14 = arith.constant 0.000000e+00 : f32
    %164 = vector.broadcast %cst_14 : f32 to vector<8x32xf32>
    %165 = vector.extract_strided_slice %160 {offsets = [0, 0], sizes = [8, 96], strides = [1, 1]} : vector<64x96xf32> to vector<8x96xf32>
    %cst_15 = arith.constant dense<0.000000e+00> : vector<8x96xf32>
    %166 = tpu.matmul %163, %161, %cst_15 {dimension_numbers = #tpu.dot_dimension_numbers<[1], [0], [0], [1], [0, 0, 1, 1], [], []>} : vector<8x32xf32>, vector<32x96xf32>, vector<8x96xf32> -> vector<8x96xf32>
    %167 = vector.broadcast %162 : vector<1x96xf32> to vector<8x96xf32>
    %168 = arith.addf %166, %167 : vector<8x96xf32>
    %169 = vector.extract_strided_slice %165 {offsets = [0, 0], sizes = [8, 32], strides = [1, 1]} : vector<8x96xf32> to vector<8x32xf32>
    %170 = vector.extract_strided_slice %168 {offsets = [0, 0], sizes = [8, 32], strides = [1, 1]} : vector<8x96xf32> to vector<8x32xf32>
    %171 = arith.addf %169, %170 : vector<8x32xf32>
    %172 = arith.negf %171 : vector<8x32xf32>
    %173 = math.exp %172 : vector<8x32xf32>
    %cst_16 = arith.constant 1.000000e+00 : f32
    %174 = vector.broadcast %cst_16 : f32 to vector<8x32xf32>
    %175 = arith.addf %174, %173 : vector<8x32xf32>
    %176 = arith.divf %174, %175 : vector<8x32xf32>
    %177 = vector.extract_strided_slice %165 {offsets = [0, 32], sizes = [8, 32], strides = [1, 1]} : vector<8x96xf32> to vector<8x32xf32>
    %178 = vector.extract_strided_slice %168 {offsets = [0, 32], sizes = [8, 32], strides = [1, 1]} : vector<8x96xf32> to vector<8x32xf32>
    %179 = arith.addf %177, %178 : vector<8x32xf32>
    %180 = arith.negf %179 : vector<8x32xf32>
    %181 = math.exp %180 : vector<8x32xf32>
    %cst_17 = arith.constant 1.000000e+00 : f32
    %182 = vector.broadcast %cst_17 : f32 to vector<8x32xf32>
    %183 = arith.addf %182, %181 : vector<8x32xf32>
    %184 = arith.divf %182, %183 : vector<8x32xf32>
    %185 = vector.extract_strided_slice %165 {offsets = [0, 64], sizes = [8, 32], strides = [1, 1]} : vector<8x96xf32> to vector<8x32xf32>
    %186 = vector.extract_strided_slice %168 {offsets = [0, 64], sizes = [8, 32], strides = [1, 1]} : vector<8x96xf32> to vector<8x32xf32>
    %187 = arith.mulf %176, %186 : vector<8x32xf32>
    %188 = arith.addf %185, %187 : vector<8x32xf32>
    %189 = math.tanh %188 : vector<8x32xf32>
    %cst_18 = arith.constant 1.000000e+00 : f32
    %190 = vector.broadcast %cst_18 : f32 to vector<8x32xf32>
    %191 = arith.subf %190, %184 : vector<8x32xf32>
    %192 = arith.mulf %191, %189 : vector<8x32xf32>
    %193 = arith.mulf %184, %163 : vector<8x32xf32>
    %194 = arith.addf %192, %193 : vector<8x32xf32>
    %195 = arith.addf %164, %194 : vector<8x32xf32>
    %196 = vector.extract_strided_slice %160 {offsets = [8, 0], sizes = [8, 96], strides = [1, 1]} : vector<64x96xf32> to vector<8x96xf32>
    %cst_19 = arith.constant dense<0.000000e+00> : vector<8x96xf32>
    %197 = tpu.matmul %194, %161, %cst_19 {dimension_numbers = #tpu.dot_dimension_numbers<[1], [0], [0], [1], [0, 0, 1, 1], [], []>} : vector<8x32xf32>, vector<32x96xf32>, vector<8x96xf32> -> vector<8x96xf32>
    %198 = vector.broadcast %162 : vector<1x96xf32> to vector<8x96xf32>
    %199 = arith.addf %197, %198 : vector<8x96xf32>
    %200 = vector.extract_strided_slice %196 {offsets = [0, 0], sizes = [8, 32], strides = [1, 1]} : vector<8x96xf32> to vector<8x32xf32>
    %201 = vector.extract_strided_slice %199 {offsets = [0, 0], sizes = [8, 32], strides = [1, 1]} : vector<8x96xf32> to vector<8x32xf32>
    %202 = arith.addf %200, %201 : vector<8x32xf32>
    %203 = arith.negf %202 : vector<8x32xf32>
    %204 = math.exp %203 : vector<8x32xf32>
    %cst_20 = arith.constant 1.000000e+00 : f32
    %205 = vector.broadcast %cst_20 : f32 to vector<8x32xf32>
    %206 = arith.addf %205, %204 : vector<8x32xf32>
    %207 = arith.divf %205, %206 : vector<8x32xf32>
    %208 = vector.extract_strided_slice %196 {offsets = [0, 32], sizes = [8, 32], strides = [1, 1]} : vector<8x96xf32> to vector<8x32xf32>
    %209 = vector.extract_strided_slice %199 {offsets = [0, 32], sizes = [8, 32], strides = [1, 1]} : vector<8x96xf32> to vector<8x32xf32>
    %210 = arith.addf %208, %209 : vector<8x32xf32>
    %211 = arith.negf %210 : vector<8x32xf32>
    %212 = math.exp %211 : vector<8x32xf32>
    %cst_21 = arith.constant 1.000000e+00 : f32
    %213 = vector.broadcast %cst_21 : f32 to vector<8x32xf32>
    %214 = arith.addf %213, %212 : vector<8x32xf32>
    %215 = arith.divf %213, %214 : vector<8x32xf32>
    %216 = vector.extract_strided_slice %196 {offsets = [0, 64], sizes = [8, 32], strides = [1, 1]} : vector<8x96xf32> to vector<8x32xf32>
    %217 = vector.extract_strided_slice %199 {offsets = [0, 64], sizes = [8, 32], strides = [1, 1]} : vector<8x96xf32> to vector<8x32xf32>
    %218 = arith.mulf %207, %217 : vector<8x32xf32>
    %219 = arith.addf %216, %218 : vector<8x32xf32>
    %220 = math.tanh %219 : vector<8x32xf32>
    %cst_22 = arith.constant 1.000000e+00 : f32
    %221 = vector.broadcast %cst_22 : f32 to vector<8x32xf32>
    %222 = arith.subf %221, %215 : vector<8x32xf32>
    %223 = arith.mulf %222, %220 : vector<8x32xf32>
    %224 = arith.mulf %215, %194 : vector<8x32xf32>
    %225 = arith.addf %223, %224 : vector<8x32xf32>
    %226 = arith.addf %195, %225 : vector<8x32xf32>
    %227 = vector.extract_strided_slice %160 {offsets = [16, 0], sizes = [8, 96], strides = [1, 1]} : vector<64x96xf32> to vector<8x96xf32>
    %cst_23 = arith.constant dense<0.000000e+00> : vector<8x96xf32>
    %228 = tpu.matmul %225, %161, %cst_23 {dimension_numbers = #tpu.dot_dimension_numbers<[1], [0], [0], [1], [0, 0, 1, 1], [], []>} : vector<8x32xf32>, vector<32x96xf32>, vector<8x96xf32> -> vector<8x96xf32>
    %229 = vector.broadcast %162 : vector<1x96xf32> to vector<8x96xf32>
    %230 = arith.addf %228, %229 : vector<8x96xf32>
    %231 = vector.extract_strided_slice %227 {offsets = [0, 0], sizes = [8, 32], strides = [1, 1]} : vector<8x96xf32> to vector<8x32xf32>
    %232 = vector.extract_strided_slice %230 {offsets = [0, 0], sizes = [8, 32], strides = [1, 1]} : vector<8x96xf32> to vector<8x32xf32>
    %233 = arith.addf %231, %232 : vector<8x32xf32>
    %234 = arith.negf %233 : vector<8x32xf32>
    %235 = math.exp %234 : vector<8x32xf32>
    %cst_24 = arith.constant 1.000000e+00 : f32
    %236 = vector.broadcast %cst_24 : f32 to vector<8x32xf32>
    %237 = arith.addf %236, %235 : vector<8x32xf32>
    %238 = arith.divf %236, %237 : vector<8x32xf32>
    %239 = vector.extract_strided_slice %227 {offsets = [0, 32], sizes = [8, 32], strides = [1, 1]} : vector<8x96xf32> to vector<8x32xf32>
    %240 = vector.extract_strided_slice %230 {offsets = [0, 32], sizes = [8, 32], strides = [1, 1]} : vector<8x96xf32> to vector<8x32xf32>
    %241 = arith.addf %239, %240 : vector<8x32xf32>
    %242 = arith.negf %241 : vector<8x32xf32>
    %243 = math.exp %242 : vector<8x32xf32>
    %cst_25 = arith.constant 1.000000e+00 : f32
    %244 = vector.broadcast %cst_25 : f32 to vector<8x32xf32>
    %245 = arith.addf %244, %243 : vector<8x32xf32>
    %246 = arith.divf %244, %245 : vector<8x32xf32>
    %247 = vector.extract_strided_slice %227 {offsets = [0, 64], sizes = [8, 32], strides = [1, 1]} : vector<8x96xf32> to vector<8x32xf32>
    %248 = vector.extract_strided_slice %230 {offsets = [0, 64], sizes = [8, 32], strides = [1, 1]} : vector<8x96xf32> to vector<8x32xf32>
    %249 = arith.mulf %238, %248 : vector<8x32xf32>
    %250 = arith.addf %247, %249 : vector<8x32xf32>
    %251 = math.tanh %250 : vector<8x32xf32>
    %cst_26 = arith.constant 1.000000e+00 : f32
    %252 = vector.broadcast %cst_26 : f32 to vector<8x32xf32>
    %253 = arith.subf %252, %246 : vector<8x32xf32>
    %254 = arith.mulf %253, %251 : vector<8x32xf32>
    %255 = arith.mulf %246, %225 : vector<8x32xf32>
    %256 = arith.addf %254, %255 : vector<8x32xf32>
    %257 = arith.addf %226, %256 : vector<8x32xf32>
    %258 = vector.extract_strided_slice %160 {offsets = [24, 0], sizes = [8, 96], strides = [1, 1]} : vector<64x96xf32> to vector<8x96xf32>
    %cst_27 = arith.constant dense<0.000000e+00> : vector<8x96xf32>
    %259 = tpu.matmul %256, %161, %cst_27 {dimension_numbers = #tpu.dot_dimension_numbers<[1], [0], [0], [1], [0, 0, 1, 1], [], []>} : vector<8x32xf32>, vector<32x96xf32>, vector<8x96xf32> -> vector<8x96xf32>
    %260 = vector.broadcast %162 : vector<1x96xf32> to vector<8x96xf32>
    %261 = arith.addf %259, %260 : vector<8x96xf32>
    %262 = vector.extract_strided_slice %258 {offsets = [0, 0], sizes = [8, 32], strides = [1, 1]} : vector<8x96xf32> to vector<8x32xf32>
    %263 = vector.extract_strided_slice %261 {offsets = [0, 0], sizes = [8, 32], strides = [1, 1]} : vector<8x96xf32> to vector<8x32xf32>
    %264 = arith.addf %262, %263 : vector<8x32xf32>
    %265 = arith.negf %264 : vector<8x32xf32>
    %266 = math.exp %265 : vector<8x32xf32>
    %cst_28 = arith.constant 1.000000e+00 : f32
    %267 = vector.broadcast %cst_28 : f32 to vector<8x32xf32>
    %268 = arith.addf %267, %266 : vector<8x32xf32>
    %269 = arith.divf %267, %268 : vector<8x32xf32>
    %270 = vector.extract_strided_slice %258 {offsets = [0, 32], sizes = [8, 32], strides = [1, 1]} : vector<8x96xf32> to vector<8x32xf32>
    %271 = vector.extract_strided_slice %261 {offsets = [0, 32], sizes = [8, 32], strides = [1, 1]} : vector<8x96xf32> to vector<8x32xf32>
    %272 = arith.addf %270, %271 : vector<8x32xf32>
    %273 = arith.negf %272 : vector<8x32xf32>
    %274 = math.exp %273 : vector<8x32xf32>
    %cst_29 = arith.constant 1.000000e+00 : f32
    %275 = vector.broadcast %cst_29 : f32 to vector<8x32xf32>
    %276 = arith.addf %275, %274 : vector<8x32xf32>
    %277 = arith.divf %275, %276 : vector<8x32xf32>
    %278 = vector.extract_strided_slice %258 {offsets = [0, 64], sizes = [8, 32], strides = [1, 1]} : vector<8x96xf32> to vector<8x32xf32>
    %279 = vector.extract_strided_slice %261 {offsets = [0, 64], sizes = [8, 32], strides = [1, 1]} : vector<8x96xf32> to vector<8x32xf32>
    %280 = arith.mulf %269, %279 : vector<8x32xf32>
    %281 = arith.addf %278, %280 : vector<8x32xf32>
    %282 = math.tanh %281 : vector<8x32xf32>
    %cst_30 = arith.constant 1.000000e+00 : f32
    %283 = vector.broadcast %cst_30 : f32 to vector<8x32xf32>
    %284 = arith.subf %283, %277 : vector<8x32xf32>
    %285 = arith.mulf %284, %282 : vector<8x32xf32>
    %286 = arith.mulf %277, %256 : vector<8x32xf32>
    %287 = arith.addf %285, %286 : vector<8x32xf32>
    %288 = arith.addf %257, %287 : vector<8x32xf32>
    %289 = vector.extract_strided_slice %160 {offsets = [32, 0], sizes = [8, 96], strides = [1, 1]} : vector<64x96xf32> to vector<8x96xf32>
    %cst_31 = arith.constant dense<0.000000e+00> : vector<8x96xf32>
    %290 = tpu.matmul %287, %161, %cst_31 {dimension_numbers = #tpu.dot_dimension_numbers<[1], [0], [0], [1], [0, 0, 1, 1], [], []>} : vector<8x32xf32>, vector<32x96xf32>, vector<8x96xf32> -> vector<8x96xf32>
    %291 = vector.broadcast %162 : vector<1x96xf32> to vector<8x96xf32>
    %292 = arith.addf %290, %291 : vector<8x96xf32>
    %293 = vector.extract_strided_slice %289 {offsets = [0, 0], sizes = [8, 32], strides = [1, 1]} : vector<8x96xf32> to vector<8x32xf32>
    %294 = vector.extract_strided_slice %292 {offsets = [0, 0], sizes = [8, 32], strides = [1, 1]} : vector<8x96xf32> to vector<8x32xf32>
    %295 = arith.addf %293, %294 : vector<8x32xf32>
    %296 = arith.negf %295 : vector<8x32xf32>
    %297 = math.exp %296 : vector<8x32xf32>
    %cst_32 = arith.constant 1.000000e+00 : f32
    %298 = vector.broadcast %cst_32 : f32 to vector<8x32xf32>
    %299 = arith.addf %298, %297 : vector<8x32xf32>
    %300 = arith.divf %298, %299 : vector<8x32xf32>
    %301 = vector.extract_strided_slice %289 {offsets = [0, 32], sizes = [8, 32], strides = [1, 1]} : vector<8x96xf32> to vector<8x32xf32>
    %302 = vector.extract_strided_slice %292 {offsets = [0, 32], sizes = [8, 32], strides = [1, 1]} : vector<8x96xf32> to vector<8x32xf32>
    %303 = arith.addf %301, %302 : vector<8x32xf32>
    %304 = arith.negf %303 : vector<8x32xf32>
    %305 = math.exp %304 : vector<8x32xf32>
    %cst_33 = arith.constant 1.000000e+00 : f32
    %306 = vector.broadcast %cst_33 : f32 to vector<8x32xf32>
    %307 = arith.addf %306, %305 : vector<8x32xf32>
    %308 = arith.divf %306, %307 : vector<8x32xf32>
    %309 = vector.extract_strided_slice %289 {offsets = [0, 64], sizes = [8, 32], strides = [1, 1]} : vector<8x96xf32> to vector<8x32xf32>
    %310 = vector.extract_strided_slice %292 {offsets = [0, 64], sizes = [8, 32], strides = [1, 1]} : vector<8x96xf32> to vector<8x32xf32>
    %311 = arith.mulf %300, %310 : vector<8x32xf32>
    %312 = arith.addf %309, %311 : vector<8x32xf32>
    %313 = math.tanh %312 : vector<8x32xf32>
    %cst_34 = arith.constant 1.000000e+00 : f32
    %314 = vector.broadcast %cst_34 : f32 to vector<8x32xf32>
    %315 = arith.subf %314, %308 : vector<8x32xf32>
    %316 = arith.mulf %315, %313 : vector<8x32xf32>
    %317 = arith.mulf %308, %287 : vector<8x32xf32>
    %318 = arith.addf %316, %317 : vector<8x32xf32>
    %319 = arith.addf %288, %318 : vector<8x32xf32>
    %320 = vector.extract_strided_slice %160 {offsets = [40, 0], sizes = [8, 96], strides = [1, 1]} : vector<64x96xf32> to vector<8x96xf32>
    %cst_35 = arith.constant dense<0.000000e+00> : vector<8x96xf32>
    %321 = tpu.matmul %318, %161, %cst_35 {dimension_numbers = #tpu.dot_dimension_numbers<[1], [0], [0], [1], [0, 0, 1, 1], [], []>} : vector<8x32xf32>, vector<32x96xf32>, vector<8x96xf32> -> vector<8x96xf32>
    %322 = vector.broadcast %162 : vector<1x96xf32> to vector<8x96xf32>
    %323 = arith.addf %321, %322 : vector<8x96xf32>
    %324 = vector.extract_strided_slice %320 {offsets = [0, 0], sizes = [8, 32], strides = [1, 1]} : vector<8x96xf32> to vector<8x32xf32>
    %325 = vector.extract_strided_slice %323 {offsets = [0, 0], sizes = [8, 32], strides = [1, 1]} : vector<8x96xf32> to vector<8x32xf32>
    %326 = arith.addf %324, %325 : vector<8x32xf32>
    %327 = arith.negf %326 : vector<8x32xf32>
    %328 = math.exp %327 : vector<8x32xf32>
    %cst_36 = arith.constant 1.000000e+00 : f32
    %329 = vector.broadcast %cst_36 : f32 to vector<8x32xf32>
    %330 = arith.addf %329, %328 : vector<8x32xf32>
    %331 = arith.divf %329, %330 : vector<8x32xf32>
    %332 = vector.extract_strided_slice %320 {offsets = [0, 32], sizes = [8, 32], strides = [1, 1]} : vector<8x96xf32> to vector<8x32xf32>
    %333 = vector.extract_strided_slice %323 {offsets = [0, 32], sizes = [8, 32], strides = [1, 1]} : vector<8x96xf32> to vector<8x32xf32>
    %334 = arith.addf %332, %333 : vector<8x32xf32>
    %335 = arith.negf %334 : vector<8x32xf32>
    %336 = math.exp %335 : vector<8x32xf32>
    %cst_37 = arith.constant 1.000000e+00 : f32
    %337 = vector.broadcast %cst_37 : f32 to vector<8x32xf32>
    %338 = arith.addf %337, %336 : vector<8x32xf32>
    %339 = arith.divf %337, %338 : vector<8x32xf32>
    %340 = vector.extract_strided_slice %320 {offsets = [0, 64], sizes = [8, 32], strides = [1, 1]} : vector<8x96xf32> to vector<8x32xf32>
    %341 = vector.extract_strided_slice %323 {offsets = [0, 64], sizes = [8, 32], strides = [1, 1]} : vector<8x96xf32> to vector<8x32xf32>
    %342 = arith.mulf %331, %341 : vector<8x32xf32>
    %343 = arith.addf %340, %342 : vector<8x32xf32>
    %344 = math.tanh %343 : vector<8x32xf32>
    %cst_38 = arith.constant 1.000000e+00 : f32
    %345 = vector.broadcast %cst_38 : f32 to vector<8x32xf32>
    %346 = arith.subf %345, %339 : vector<8x32xf32>
    %347 = arith.mulf %346, %344 : vector<8x32xf32>
    %348 = arith.mulf %339, %318 : vector<8x32xf32>
    %349 = arith.addf %347, %348 : vector<8x32xf32>
    %350 = arith.addf %319, %349 : vector<8x32xf32>
    %351 = vector.extract_strided_slice %160 {offsets = [48, 0], sizes = [8, 96], strides = [1, 1]} : vector<64x96xf32> to vector<8x96xf32>
    %cst_39 = arith.constant dense<0.000000e+00> : vector<8x96xf32>
    %352 = tpu.matmul %349, %161, %cst_39 {dimension_numbers = #tpu.dot_dimension_numbers<[1], [0], [0], [1], [0, 0, 1, 1], [], []>} : vector<8x32xf32>, vector<32x96xf32>, vector<8x96xf32> -> vector<8x96xf32>
    %353 = vector.broadcast %162 : vector<1x96xf32> to vector<8x96xf32>
    %354 = arith.addf %352, %353 : vector<8x96xf32>
    %355 = vector.extract_strided_slice %351 {offsets = [0, 0], sizes = [8, 32], strides = [1, 1]} : vector<8x96xf32> to vector<8x32xf32>
    %356 = vector.extract_strided_slice %354 {offsets = [0, 0], sizes = [8, 32], strides = [1, 1]} : vector<8x96xf32> to vector<8x32xf32>
    %357 = arith.addf %355, %356 : vector<8x32xf32>
    %358 = arith.negf %357 : vector<8x32xf32>
    %359 = math.exp %358 : vector<8x32xf32>
    %cst_40 = arith.constant 1.000000e+00 : f32
    %360 = vector.broadcast %cst_40 : f32 to vector<8x32xf32>
    %361 = arith.addf %360, %359 : vector<8x32xf32>
    %362 = arith.divf %360, %361 : vector<8x32xf32>
    %363 = vector.extract_strided_slice %351 {offsets = [0, 32], sizes = [8, 32], strides = [1, 1]} : vector<8x96xf32> to vector<8x32xf32>
    %364 = vector.extract_strided_slice %354 {offsets = [0, 32], sizes = [8, 32], strides = [1, 1]} : vector<8x96xf32> to vector<8x32xf32>
    %365 = arith.addf %363, %364 : vector<8x32xf32>
    %366 = arith.negf %365 : vector<8x32xf32>
    %367 = math.exp %366 : vector<8x32xf32>
    %cst_41 = arith.constant 1.000000e+00 : f32
    %368 = vector.broadcast %cst_41 : f32 to vector<8x32xf32>
    %369 = arith.addf %368, %367 : vector<8x32xf32>
    %370 = arith.divf %368, %369 : vector<8x32xf32>
    %371 = vector.extract_strided_slice %351 {offsets = [0, 64], sizes = [8, 32], strides = [1, 1]} : vector<8x96xf32> to vector<8x32xf32>
    %372 = vector.extract_strided_slice %354 {offsets = [0, 64], sizes = [8, 32], strides = [1, 1]} : vector<8x96xf32> to vector<8x32xf32>
    %373 = arith.mulf %362, %372 : vector<8x32xf32>
    %374 = arith.addf %371, %373 : vector<8x32xf32>
    %375 = math.tanh %374 : vector<8x32xf32>
    %cst_42 = arith.constant 1.000000e+00 : f32
    %376 = vector.broadcast %cst_42 : f32 to vector<8x32xf32>
    %377 = arith.subf %376, %370 : vector<8x32xf32>
    %378 = arith.mulf %377, %375 : vector<8x32xf32>
    %379 = arith.mulf %370, %349 : vector<8x32xf32>
    %380 = arith.addf %378, %379 : vector<8x32xf32>
    %381 = arith.addf %350, %380 : vector<8x32xf32>
    %382 = vector.extract_strided_slice %160 {offsets = [56, 0], sizes = [8, 96], strides = [1, 1]} : vector<64x96xf32> to vector<8x96xf32>
    %cst_43 = arith.constant dense<0.000000e+00> : vector<8x96xf32>
    %383 = tpu.matmul %380, %161, %cst_43 {dimension_numbers = #tpu.dot_dimension_numbers<[1], [0], [0], [1], [0, 0, 1, 1], [], []>} : vector<8x32xf32>, vector<32x96xf32>, vector<8x96xf32> -> vector<8x96xf32>
    %384 = vector.broadcast %162 : vector<1x96xf32> to vector<8x96xf32>
    %385 = arith.addf %383, %384 : vector<8x96xf32>
    %386 = vector.extract_strided_slice %382 {offsets = [0, 0], sizes = [8, 32], strides = [1, 1]} : vector<8x96xf32> to vector<8x32xf32>
    %387 = vector.extract_strided_slice %385 {offsets = [0, 0], sizes = [8, 32], strides = [1, 1]} : vector<8x96xf32> to vector<8x32xf32>
    %388 = arith.addf %386, %387 : vector<8x32xf32>
    %389 = arith.negf %388 : vector<8x32xf32>
    %390 = math.exp %389 : vector<8x32xf32>
    %cst_44 = arith.constant 1.000000e+00 : f32
    %391 = vector.broadcast %cst_44 : f32 to vector<8x32xf32>
    %392 = arith.addf %391, %390 : vector<8x32xf32>
    %393 = arith.divf %391, %392 : vector<8x32xf32>
    %394 = vector.extract_strided_slice %382 {offsets = [0, 32], sizes = [8, 32], strides = [1, 1]} : vector<8x96xf32> to vector<8x32xf32>
    %395 = vector.extract_strided_slice %385 {offsets = [0, 32], sizes = [8, 32], strides = [1, 1]} : vector<8x96xf32> to vector<8x32xf32>
    %396 = arith.addf %394, %395 : vector<8x32xf32>
    %397 = arith.negf %396 : vector<8x32xf32>
    %398 = math.exp %397 : vector<8x32xf32>
    %cst_45 = arith.constant 1.000000e+00 : f32
    %399 = vector.broadcast %cst_45 : f32 to vector<8x32xf32>
    %400 = arith.addf %399, %398 : vector<8x32xf32>
    %401 = arith.divf %399, %400 : vector<8x32xf32>
    %402 = vector.extract_strided_slice %382 {offsets = [0, 64], sizes = [8, 32], strides = [1, 1]} : vector<8x96xf32> to vector<8x32xf32>
    %403 = vector.extract_strided_slice %385 {offsets = [0, 64], sizes = [8, 32], strides = [1, 1]} : vector<8x96xf32> to vector<8x32xf32>
    %404 = arith.mulf %393, %403 : vector<8x32xf32>
    %405 = arith.addf %402, %404 : vector<8x32xf32>
    %406 = math.tanh %405 : vector<8x32xf32>
    %cst_46 = arith.constant 1.000000e+00 : f32
    %407 = vector.broadcast %cst_46 : f32 to vector<8x32xf32>
    %408 = arith.subf %407, %401 : vector<8x32xf32>
    %409 = arith.mulf %408, %406 : vector<8x32xf32>
    %410 = arith.mulf %401, %380 : vector<8x32xf32>
    %411 = arith.addf %409, %410 : vector<8x32xf32>
    %412 = arith.addf %381, %411 : vector<8x32xf32>
    %cst_47 = arith.constant 1.250000e-01 : f32
    %413 = vector.broadcast %cst_47 : f32 to vector<8x32xf32>
    %414 = arith.mulf %412, %413 : vector<8x32xf32>
    %c0_48 = arith.constant 0 : index
    %c0_49 = arith.constant 0 : index
    %415 = vector.load %arg7[%c0_48, %c0_49] : memref<32x16xf32, #tpu.memory_space<vmem>>, vector<32x16xf32>
    %cst_50 = arith.constant dense<0.000000e+00> : vector<8x16xf32>
    %416 = tpu.matmul %414, %415, %cst_50 {dimension_numbers = #tpu.dot_dimension_numbers<[1], [0], [0], [1], [0, 0, 1, 1], [], []>} : vector<8x32xf32>, vector<32x16xf32>, vector<8x16xf32> -> vector<8x16xf32>
    %c0_51 = arith.constant 0 : index
    %c0_52 = arith.constant 0 : index
    %417 = vector.load %arg8[%c0_51, %c0_52] : memref<1x16xf32, #tpu.memory_space<vmem>>, vector<1x16xf32>
    %418 = vector.broadcast %417 : vector<1x16xf32> to vector<8x16xf32>
    %419 = arith.addf %416, %418 : vector<8x16xf32>
    %420 = vector.extract_strided_slice %419 {offsets = [0, 0], sizes = [2, 16], strides = [1, 1]} : vector<8x16xf32> to vector<2x16xf32>
    %421 = vector.extract_strided_slice %419 {offsets = [2, 0], sizes = [2, 16], strides = [1, 1]} : vector<8x16xf32> to vector<2x16xf32>
    %422 = arith.addf %420, %421 : vector<2x16xf32>
    %423 = vector.extract_strided_slice %419 {offsets = [4, 0], sizes = [2, 16], strides = [1, 1]} : vector<8x16xf32> to vector<2x16xf32>
    %424 = arith.addf %422, %423 : vector<2x16xf32>
    %cst_53 = arith.constant 0.333333343 : f32
    %425 = vector.broadcast %cst_53 : f32 to vector<2x16xf32>
    %426 = arith.mulf %424, %425 : vector<2x16xf32>
    %427 = vector.extract_strided_slice %419 {offsets = [6, 0], sizes = [2, 16], strides = [1, 1]} : vector<8x16xf32> to vector<2x16xf32>
    %c0_54 = arith.constant 0 : index
    %c0_55 = arith.constant 0 : index
    %428 = vector.load %arg9[%c0_54, %c0_55] : memref<16x16xf32, #tpu.memory_space<vmem>>, vector<16x16xf32>
    %cst_56 = arith.constant dense<0.000000e+00> : vector<2x16xf32>
    %429 = tpu.matmul %426, %428, %cst_56 {dimension_numbers = #tpu.dot_dimension_numbers<[1], [0], [0], [1], [0, 0, 1, 1], [], []>} : vector<2x16xf32>, vector<16x16xf32>, vector<2x16xf32> -> vector<2x16xf32>
    %cst_57 = arith.constant dense<0.000000e+00> : vector<2x16xf32>
    %430 = tpu.matmul %427, %428, %cst_57 {dimension_numbers = #tpu.dot_dimension_numbers<[1], [0], [0], [1], [0, 0, 1, 1], [], []>} : vector<2x16xf32>, vector<16x16xf32>, vector<2x16xf32> -> vector<2x16xf32>
    %c36 = arith.constant 36 : index
    %431 = memref.load %arg0[%c36] : memref<38xf32, #tpu.memory_space<smem>>
    %c37 = arith.constant 37 : index
    %432 = memref.load %arg0[%c37] : memref<38xf32, #tpu.memory_space<smem>>
    %433 = arith.mulf %426, %427 : vector<2x16xf32>
    %cst_58 = arith.constant dense<0.000000e+00> : vector<2xf32>
    %434 = vector.multi_reduction <add>, %433, %cst_58 [1] : vector<2x16xf32> to vector<2xf32>
    %435 = vector.shape_cast %434 : vector<2xf32> to vector<2x1xf32>
    %436 = vector.broadcast %431 : f32 to vector<2x1xf32>
    %437 = arith.mulf %436, %435 : vector<2x1xf32>
    %438 = arith.mulf %426, %429 : vector<2x16xf32>
    %cst_59 = arith.constant dense<0.000000e+00> : vector<2xf32>
    %439 = vector.multi_reduction <add>, %438, %cst_59 [1] : vector<2x16xf32> to vector<2xf32>
    %440 = vector.shape_cast %439 : vector<2xf32> to vector<2x1xf32>
    %441 = arith.subf %437, %440 : vector<2x1xf32>
    %442 = arith.mulf %427, %430 : vector<2x16xf32>
    %cst_60 = arith.constant dense<0.000000e+00> : vector<2xf32>
    %443 = vector.multi_reduction <add>, %442, %cst_60 [1] : vector<2x16xf32> to vector<2xf32>
    %444 = vector.shape_cast %443 : vector<2xf32> to vector<2x1xf32>
    %445 = arith.subf %441, %444 : vector<2x1xf32>
    %446 = vector.broadcast %432 : f32 to vector<2x1xf32>
    %447 = arith.addf %445, %446 : vector<2x1xf32>
    %c0_61 = arith.constant 0 : index
    %c0_62 = arith.constant 0 : index
    %448 = vector.load %arg10[%c0_61, %c0_62] : memref<2x1xf32, #tpu.memory_space<vmem>>, vector<2x1xf32>
    tpu.vector_store %arg10[%c0_61, %c0_62], %447 {strides = array<i32>} : memref<2x1xf32, #tpu.memory_space<vmem>>, vector<2x1xf32>,
    return
  }
}

</mosaic_0001>

<llo_original>
// kernel: speaker_verifier_forward.1
$region0: #{speaker_verifier_forward.1}
  #allocation0 [shape = 'u32[]', space=smem, size = 0x4, offset = 0x4, fixed_abs, tag = 'smem constant byte address 0x4 - core index']
  #allocation1 [shape = 'u32[144,128]{1,0:T(1,128)}', space=vmem, size = 0x12000, scoped, tag = 'internal scratch']
  %s0 = inlined_call_operand.vmem [shape: f32[38], index: 0, kind: input, shape index: {}]
  %s1 = inlined_call_operand.vmem [shape: f32[80,16], index: 1, kind: input, shape index: {}]
  %s2 = inlined_call_operand.vmem [shape: f32[1,56], index: 2, kind: input, shape index: {}]
  %s3 = inlined_call_operand.vmem [shape: f32[56,96], index: 3, kind: input, shape index: {}]
  %s4 = inlined_call_operand.vmem [shape: f32[1,96], index: 4, kind: input, shape index: {}]
  %s5 = inlined_call_operand.vmem [shape: f32[32,96], index: 5, kind: input, shape index: {}]
  %s6 = inlined_call_operand.vmem [shape: f32[1,96], index: 6, kind: input, shape index: {}]
  %s7 = inlined_call_operand.vmem [shape: f32[32,16], index: 7, kind: input, shape index: {}]
  %s8 = inlined_call_operand.vmem [shape: f32[1,16], index: 8, kind: input, shape index: {}]
  %s9 = inlined_call_operand.vmem [shape: f32[16,16], index: 9, kind: input, shape index: {}]
  %s10 = inlined_call_operand.vmem [shape: f32[2,1], index: 10, kind: output, shape index: {}]
  %s11 = sld [smem:[#allocation0]]
  $region54: #{speaker_verifier_forward.1} parent=0
    _
  %s13 = ssub.s32 1, %s11
  %s14 = scalar_select 0, %s13, %s11
  $region1: #{speaker_verifier_forward.1} parent=0
    #allocation2 [shape = 'u8[512]{0}', space=smem, size = 0x200, scoped, tag = 'input window, operand 0, single buffered']
    #allocation3 [shape = 's32[1]{0}', space=sflag, size = 0x4, scoped, tag = 'scoped memory for speaker_verifier_forward.1']
    %15 = vsyncpa [#allocation3], 0
    // Predicated region
    $region2: #{speaker_verifier_forward.1} parent=1 // pred_check
      _
    $region3: #{speaker_verifier_forward.1} parent=1 // pred_check_branch
      %17 = sbr.rel (0) target = $region5
    $region4: #{speaker_verifier_forward.1} parent=1 // pred_region
      %s19 = ssub.s32 16, 16
      %20 = vsyncadd [#allocation3], %s19
      %s22 = sshll.u32 %s0, 4
      %s23 = int_to_ptr.vmem [resolvable:$true] %s22
      %25 = dma.vmem_to_smem %s23, 16, [#allocation2], [#allocation3]
    $region5: #{speaker_verifier_forward.1} parent=1 // pred_fallthru
      _
    // Predicated region
    $region6: #{speaker_verifier_forward.1} parent=1 // pred_check
      _
    $region7: #{speaker_verifier_forward.1} parent=1 // pred_check_branch
      %27 = sbr.rel (0) target = $region9
    $region8: #{speaker_verifier_forward.1} parent=1 // pred_region
      _
    $region9: #{speaker_verifier_forward.1} parent=1 // pred_fallthru
      _
    // Predicated region
    $region10: #{speaker_verifier_forward.1} parent=1 // pred_check
      _
    $region11: #{speaker_verifier_forward.1} parent=1 // pred_check_branch
      %29 = sbr.rel (0) target = $region13
    $region12: #{speaker_verifier_forward.1} parent=1 // pred_region
      _
    $region13: #{speaker_verifier_forward.1} parent=1 // pred_fallthru
      _
    // Predicated region
    $region14: #{speaker_verifier_forward.1} parent=1 // pred_check
      _
    $region15: #{speaker_verifier_forward.1} parent=1 // pred_check_branch
      %31 = sbr.rel (0) target = $region17
    $region16: #{speaker_verifier_forward.1} parent=1 // pred_region
      _
    $region17: #{speaker_verifier_forward.1} parent=1 // pred_fallthru
      _
    // Predicated region
    $region18: #{speaker_verifier_forward.1} parent=1 // pred_check
      _
    $region19: #{speaker_verifier_forward.1} parent=1 // pred_check_branch
      %33 = sbr.rel (0) target = $region21
    $region20: #{speaker_verifier_forward.1} parent=1 // pred_region
      _
    $region21: #{speaker_verifier_forward.1} parent=1 // pred_fallthru
      _
    // Predicated region
    $region22: #{speaker_verifier_forward.1} parent=1 // pred_check
      _
    $region23: #{speaker_verifier_forward.1} parent=1 // pred_check_branch
      %35 = sbr.rel (0) target = $region25
    $region24: #{speaker_verifier_forward.1} parent=1 // pred_region
      _
    $region25: #{speaker_verifier_forward.1} parent=1 // pred_fallthru
      _
    // Predicated region
    $region26: #{speaker_verifier_forward.1} parent=1 // pred_check
      _
    $region27: #{speaker_verifier_forward.1} parent=1 // pred_check_branch
      %37 = sbr.rel (0) target = $region29
    $region28: #{speaker_verifier_forward.1} parent=1 // pred_region
      _
    $region29: #{speaker_verifier_forward.1} parent=1 // pred_fallthru
      _
    // Predicated region
    $region30: #{speaker_verifier_forward.1} parent=1 // pred_check
      _
    $region31: #{speaker_verifier_forward.1} parent=1 // pred_check_branch
      %39 = sbr.rel (0) target = $region33
    $region32: #{speaker_verifier_forward.1} parent=1 // pred_region
      _
    $region33: #{speaker_verifier_forward.1} parent=1 // pred_fallthru
      _
    // Predicated region
    $region34: #{speaker_verifier_forward.1} parent=1 // pred_check
      _
    $region35: #{speaker_verifier_forward.1} parent=1 // pred_check_branch
      %41 = sbr.rel (0) target = $region37
    $region36: #{speaker_verifier_forward.1} parent=1 // pred_region
      _
    $region37: #{speaker_verifier_forward.1} parent=1 // pred_fallthru
      _
    // Predicated region
    $region38: #{speaker_verifier_forward.1} parent=1 // pred_check
      _
    $region39: #{speaker_verifier_forward.1} parent=1 // pred_check_branch
      %43 = sbr.rel (0) target = $region41
    $region40: #{speaker_verifier_forward.1} parent=1 // pred_region
      _
    $region41: #{speaker_verifier_forward.1} parent=1 // pred_fallthru
      _
    // Predicated region
    $region42: #{speaker_verifier_forward.1} parent=1 // pred_check
      _
    $region43: #{speaker_verifier_forward.1} parent=1 // pred_check_branch
      %45 = sbr.rel (0) target = $region45
    $region44: #{speaker_verifier_forward.1} parent=1 // pred_region
      %46 = dma.done [#allocation3], 16
    $region45: #{speaker_verifier_forward.1} parent=1 // pred_fallthru
      _
    %47 = sfence
    %v48 = vld [vmem:[%s1] sm:$0xff]
    %v49 = vld [vmem:[%s1 + $0x8] sm:$0xff]
    %v50 = vld [vmem:[%s1 + $0x10] sm:$0xff]
    %v51 = vld [vmem:[%s1 + $0x18] sm:$0xff]
    %v52 = vld [vmem:[%s1 + $0x20] sm:$0xff]
    %v53 = vld [vmem:[%s1 + $0x28] sm:$0xff]
    %v54 = vld [vmem:[%s1 + $0x30] sm:$0xff]
    %v55 = vld [vmem:[%s1 + $0x38] sm:$0xff]
    %v56 = vld [vmem:[%s1 + $0x40] sm:$0xff]
    %v57 = vld [vmem:[%s1 + $0x48] sm:$0xff]
    %s58 = sld [smem:[#allocation2]]
    %v59 = vstv %s58
    %v60 = vmul.f32 %v59, %v48
    %v61 = vmul.f32 %v59, %v49
    %v62 = vmul.f32 %v59, %v50
    %v63 = vmul.f32 %v59, %v51
    %v64 = vmul.f32 %v59, %v52
    %v65 = vmul.f32 %v59, %v53
    %v66 = vmul.f32 %v59, %v54
    %v67 = vmul.f32 %v59, %v55
    %s68 = sld [smem:[#allocation2 + $0x9]]
    %v69 = vstv %s68
    %v70 = vmul.f32 %v69, %v48
    %v71 = vmul.f32 %v69, %v49
    %v72 = vmul.f32 %v69, %v50
    %v73 = vmul.f32 %v69, %v51
    %v74 = vmul.f32 %v69, %v52
    %v75 = vmul.f32 %v69, %v53
    %v76 = vmul.f32 %v69, %v54
    %v77 = vmul.f32 %v69, %v55
    %s78 = sld [smem:[#allocation2 + $0x12]]
    %v79 = vstv %s78
    %v80 = vmul.f32 %v79, %v48
    %v81 = vmul.f32 %v79, %v49
    %v82 = vmul.f32 %v79, %v50
    %v83 = vmul.f32 %v79, %v51
    %v84 = vmul.f32 %v79, %v52
    %v85 = vmul.f32 %v79, %v53
    %v86 = vmul.f32 %v79, %v54
    %v87 = vmul.f32 %v79, %v55
    %s88 = sld [smem:[#allocation2 + $0x1b]]
    %v89 = vstv %s88
    %v90 = vmul.f32 %v89, %v48
    %v91 = vmul.f32 %v89, %v49
    %v92 = vmul.f32 %v89, %v50
    %v93 = vmul.f32 %v89, %v51
    %v94 = vmul.f32 %v89, %v52
    %v95 = vmul.f32 %v89, %v53
    %v96 = vmul.f32 %v89, %v54
    %v97 = vmul.f32 %v89, %v55
    %s98 = sld [smem:[#allocation2 + $0x1]]
    %v99 = vstv %s98
    %v100 = vmul.f32 %v99, %v48
    %v101 = vmul.f32 %v99, %v49
    %v102 = vmul.f32 %v99, %v50
    %v103 = vmul.f32 %v99, %v51
    %v104 = vmul.f32 %v99, %v52
    %v105 = vmul.f32 %v99, %v53
    %v106 = vmul.f32 %v99, %v54
    %v107 = vmul.f32 %v99, %v55
    %116 = vrot.lane.b32.xlu0 %v100, 127
    %v117 = vpop.permute.xlu0 %116
    %118 = vrot.lane.b32.xlu0 %v101, 127
    %v119 = vpop.permute.xlu0 %118
    %120 = vrot.lane.b32.xlu0 %v102, 127
    %v121 = vpop.permute.xlu0 %120
    %122 = vrot.lane.b32.xlu0 %v103, 127
    %v123 = vpop.permute.xlu0 %122
    %124 = vrot.lane.b32.xlu0 %v104, 127
    %v125 = vpop.permute.xlu0 %124
    %126 = vrot.lane.b32.xlu0 %v105, 127
    %v127 = vpop.permute.xlu0 %126
    %128 = vrot.lane.b32.xlu0 %v106, 127
    %v129 = vpop.permute.xlu0 %128
    %130 = vrot.lane.b32.xlu0 %v107, 127
    %v131 = vpop.permute.xlu0 %130
    %v140 = vadd.f32 %v60, %v117
    %v141 = vadd.f32 %v61, %v119
    %v142 = vadd.f32 %v62, %v121
    %v143 = vadd.f32 %v63, %v123
    %v144 = vadd.f32 %v64, %v125
    %v145 = vadd.f32 %v65, %v127
    %v146 = vadd.f32 %v66, %v129
    %v147 = vadd.f32 %v67, %v131
    %s148 = sld [smem:[#allocation2 + $0xa]]
    %v149 = vstv %s148
    %v150 = vmul.f32 %v149, %v48
    %v151 = vmul.f32 %v149, %v49
    %v152 = vmul.f32 %v149, %v50
    %v153 = vmul.f32 %v149, %v51
    %v154 = vmul.f32 %v149, %v52
    %v155 = vmul.f32 %v149, %v53
    %v156 = vmul.f32 %v149, %v54
    %v157 = vmul.f32 %v149, %v55
    %166 = vrot.lane.b32.xlu0 %v150, 127
    %v167 = vpop.permute.xlu0 %166
    %168 = vrot.lane.b32.xlu0 %v151, 127
    %v169 = vpop.permute.xlu0 %168
    %170 = vrot.lane.b32.xlu0 %v152, 127
    %v171 = vpop.permute.xlu0 %170
    %172 = vrot.lane.b32.xlu0 %v153, 127
    %v173 = vpop.permute.xlu0 %172
    %174 = vrot.lane.b32.xlu0 %v154, 127
    %v175 = vpop.permute.xlu0 %174
    %176 = vrot.lane.b32.xlu0 %v155, 127
    %v177 = vpop.permute.xlu0 %176
    %178 = vrot.lane.b32.xlu0 %v156, 127
    %v179 = vpop.permute.xlu0 %178
    %180 = vrot.lane.b32.xlu0 %v157, 127
    %v181 = vpop.permute.xlu0 %180
    %v190 = vadd.f32 %v70, %v167
    %v191 = vadd.f32 %v71, %v169
    %v192 = vadd.f32 %v72, %v171
    %v193 = vadd.f32 %v73, %v173
    %v194 = vadd.f32 %v74, %v175
    %v195 = vadd.f32 %v75, %v177
    %v196 = vadd.f32 %v76, %v179
    %v197 = vadd.f32 %v77, %v181
    %s198 = sld [smem:[#allocation2 + $0x13]]
    %v199 = vstv %s198
    %v200 = vmul.f32 %v199, %v48
    %v201 = vmul.f32 %v199, %v49
    %v202 = vmul.f32 %v199, %v50
    %v203 = vmul.f32 %v199, %v51
    %v204 = vmul.f32 %v199, %v52
    %v205 = vmul.f32 %v199, %v53
    %v206 = vmul.f32 %v199, %v54
    %v207 = vmul.f32 %v199, %v55
    %216 = vrot.lane.b32.xlu0 %v200, 127
    %v217 = vpop.permute.xlu0 %216
    %218 = vrot.lane.b32.xlu0 %v201, 127
    %v219 = vpop.permute.xlu0 %218
    %220 = vrot.lane.b32.xlu0 %v202, 127
    %v221 = vpop.permute.xlu0 %220
    %222 = vrot.lane.b32.xlu0 %v203, 127
    %v223 = vpop.permute.xlu0 %222
    %224 = vrot.lane.b32.xlu0 %v204, 127
    %v225 = vpop.permute.xlu0 %224
    %226 = vrot.lane.b32.xlu0 %v205, 127
    %v227 = vpop.permute.xlu0 %226
    %228 = vrot.lane.b32.xlu0 %v206, 127
    %v229 = vpop.permute.xlu0 %228
    %230 = vrot.lane.b32.xlu0 %v207, 127
    %v231 = vpop.permute.xlu0 %230
    %v240 = vadd.f32 %v80, %v217
    %v241 = vadd.f32 %v81, %v219
    %v242 = vadd.f32 %v82, %v221
    %v243 = vadd.f32 %v83, %v223
    %v244 = vadd.f32 %v84, %v225
    %v245 = vadd.f32 %v85, %v227
    %v246 = vadd.f32 %v86, %v229
    %v247 = vadd.f32 %v87, %v231
    %s248 = sld [smem:[#allocation2 + $0x1c]]
    %v249 = vstv %s248
    %v250 = vmul.f32 %v249, %v48
    %v251 = vmul.f32 %v249, %v49
    %v252 = vmul.f32 %v249, %v50
    %v253 = vmul.f32 %v249, %v51
    %v254 = vmul.f32 %v249, %v52
    %v255 = vmul.f32 %v249, %v53
    %v256 = vmul.f32 %v249, %v54
    %v257 = vmul.f32 %v249, %v55
    %266 = vrot.lane.b32.xlu0 %v250, 127
    %v267 = vpop.permute.xlu0 %266
    %268 = vrot.lane.b32.xlu0 %v251, 127
    %v269 = vpop.permute.xlu0 %268
    %270 = vrot.lane.b32.xlu0 %v252, 127
    %v271 = vpop.permute.xlu0 %270
    %272 = vrot.lane.b32.xlu0 %v253, 127
    %v273 = vpop.permute.xlu0 %272
    %274 = vrot.lane.b32.xlu0 %v254, 127
    %v275 = vpop.permute.xlu0 %274
    %276 = vrot.lane.b32.xlu0 %v255, 127
    %v277 = vpop.permute.xlu0 %276
    %278 = vrot.lane.b32.xlu0 %v256, 127
    %v279 = vpop.permute.xlu0 %278
    %280 = vrot.lane.b32.xlu0 %v257, 127
    %v281 = vpop.permute.xlu0 %280
    %v290 = vadd.f32 %v90, %v267
    %v291 = vadd.f32 %v91, %v269
    %v292 = vadd.f32 %v92, %v271
    %v293 = vadd.f32 %v93, %v273
    %v294 = vadd.f32 %v94, %v275
    %v295 = vadd.f32 %v95, %v277
    %v296 = vadd.f32 %v96, %v279
    %v297 = vadd.f32 %v97, %v281
    %s298 = sld [smem:[#allocation2 + $0x2]]
    %v299 = vstv %s298
    %v300 = vmul.f32 %v299, %v48
    %v301 = vmul.f32 %v299, %v49
    %v302 = vmul.f32 %v299, %v50
    %v303 = vmul.f32 %v299, %v51
    %v304 = vmul.f32 %v299, %v52
    %v305 = vmul.f32 %v299, %v53
    %v306 = vmul.f32 %v299, %v54
    %v307 = vmul.f32 %v299, %v55
    %316 = vrot.lane.b32.xlu0 %v300, 126
    %v317 = vpop.permute.xlu0 %316
    %318 = vrot.lane.b32.xlu0 %v301, 126
    %v319 = vpop.permute.xlu0 %318
    %320 = vrot.lane.b32.xlu0 %v302, 126
    %v321 = vpop.permute.xlu0 %320
    %322 = vrot.lane.b32.xlu0 %v303, 126
    %v323 = vpop.permute.xlu0 %322
    %324 = vrot.lane.b32.xlu0 %v304, 126
    %v325 = vpop.permute.xlu0 %324
    %326 = vrot.lane.b32.xlu0 %v305, 126
    %v327 = vpop.permute.xlu0 %326
    %328 = vrot.lane.b32.xlu0 %v306, 126
    %v329 = vpop.permute.xlu0 %328
    %330 = vrot.lane.b32.xlu0 %v307, 126
    %v331 = vpop.permute.xlu0 %330
    %v340 = vadd.f32 %v140, %v317
    %v341 = vadd.f32 %v141, %v319
    %v342 = vadd.f32 %v142, %v321
    %v343 = vadd.f32 %v143, %v323
    %v344 = vadd.f32 %v144, %v325
    %v345 = vadd.f32 %v145, %v327
    %v346 = vadd.f32 %v146, %v329
    %v347 = vadd.f32 %v147, %v331
    %s348 = sld [smem:[#allocation2 + $0xb]]
    %v349 = vstv %s348
    %v350 = vmul.f32 %v349, %v48
    %v351 = vmul.f32 %v349, %v49
    %v352 = vmul.f32 %v349, %v50
    %v353 = vmul.f32 %v349, %v51
    %v354 = vmul.f32 %v349, %v52
    %v355 = vmul.f32 %v349, %v53
    %v356 = vmul.f32 %v349, %v54
    %v357 = vmul.f32 %v349, %v55
    %366 = vrot.lane.b32.xlu0 %v350, 126
    %v367 = vpop.permute.xlu0 %366
    %368 = vrot.lane.b32.xlu0 %v351, 126
    %v369 = vpop.permute.xlu0 %368
    %370 = vrot.lane.b32.xlu0 %v352, 126
    %v371 = vpop.permute.xlu0 %370
    %372 = vrot.lane.b32.xlu0 %v353, 126
    %v373 = vpop.permute.xlu0 %372
    %374 = vrot.lane.b32.xlu0 %v354, 126
    %v375 = vpop.permute.xlu0 %374
    %376 = vrot.lane.b32.xlu0 %v355, 126
    %v377 = vpop.permute.xlu0 %376
    %378 = vrot.lane.b32.xlu0 %v356, 126
    %v379 = vpop.permute.xlu0 %378
    %380 = vrot.lane.b32.xlu0 %v357, 126
    %v381 = vpop.permute.xlu0 %380
    %v390 = vadd.f32 %v190, %v367
    %v391 = vadd.f32 %v191, %v369
    %v392 = vadd.f32 %v192, %v371
    %v393 = vadd.f32 %v193, %v373
    %v394 = vadd.f32 %v194, %v375
    %v395 = vadd.f32 %v195, %v377
    %v396 = vadd.f32 %v196, %v379
    %v397 = vadd.f32 %v197, %v381
    %s398 = sld [smem:[#allocation2 + $0x14]]
    %v399 = vstv %s398
    %v400 = vmul.f32 %v399, %v48
    %v401 = vmul.f32 %v399, %v49
    %v402 = vmul.f32 %v399, %v50
    %v403 = vmul.f32 %v399, %v51
    %v404 = vmul.f32 %v399, %v52
    %v405 = vmul.f32 %v399, %v53
    %v406 = vmul.f32 %v399, %v54
    %v407 = vmul.f32 %v399, %v55
    %416 = vrot.lane.b32.xlu0 %v400, 126
    %v417 = vpop.permute.xlu0 %416
    %418 = vrot.lane.b32.xlu0 %v401, 126
    %v419 = vpop.permute.xlu0 %418
    %420 = vrot.lane.b32.xlu0 %v402, 126
    %v421 = vpop.permute.xlu0 %420
    %422 = vrot.lane.b32.xlu0 %v403, 126
    %v423 = vpop.permute.xlu0 %422
    %424 = vrot.lane.b32.xlu0 %v404, 126
    %v425 = vpop.permute.xlu0 %424
    %426 = vrot.lane.b32.xlu0 %v405, 126
    %v427 = vpop.permute.xlu0 %426
    %428 = vrot.lane.b32.xlu0 %v406, 126
    %v429 = vpop.permute.xlu0 %428
    %430 = vrot.lane.b32.xlu0 %v407, 126
    %v431 = vpop.permute.xlu0 %430
    %v440 = vadd.f32 %v240, %v417
    %v441 = vadd.f32 %v241, %v419
    %v442 = vadd.f32 %v242, %v421
    %v443 = vadd.f32 %v243, %v423
    %v444 = vadd.f32 %v244, %v425
    %v445 = vadd.f32 %v245, %v427
    %v446 = vadd.f32 %v246, %v429
    %v447 = vadd.f32 %v247, %v431
    %s448 = sld [smem:[#allocation2 + $0x1d]]
    %v449 = vstv %s448
    %v450 = vmul.f32 %v449, %v48
    %v451 = vmul.f32 %v449, %v49
    %v452 = vmul.f32 %v449, %v50
    %v453 = vmul.f32 %v449, %v51
    %v454 = vmul.f32 %v449, %v52
    %v455 = vmul.f32 %v449, %v53
    %v456 = vmul.f32 %v449, %v54
    %v457 = vmul.f32 %v449, %v55
    %466 = vrot.lane.b32.xlu0 %v450, 126
    %v467 = vpop.permute.xlu0 %466
    %468 = vrot.lane.b32.xlu0 %v451, 126
    %v469 = vpop.permute.xlu0 %468
    %470 = vrot.lane.b32.xlu0 %v452, 126
    %v471 = vpop.permute.xlu0 %470
    %472 = vrot.lane.b32.xlu0 %v453, 126
    %v473 = vpop.permute.xlu0 %472
    %474 = vrot.lane.b32.xlu0 %v454, 126
    %v475 = vpop.permute.xlu0 %474
    %476 = vrot.lane.b32.xlu0 %v455, 126
    %v477 = vpop.permute.xlu0 %476
    %478 = vrot.lane.b32.xlu0 %v456, 126
    %v479 = vpop.permute.xlu0 %478
    %480 = vrot.lane.b32.xlu0 %v457, 126
    %v481 = vpop.permute.xlu0 %480
    %v490 = vadd.f32 %v290, %v467
    %v491 = vadd.f32 %v291, %v469
    %v492 = vadd.f32 %v292, %v471
    %v493 = vadd.f32 %v293, %v473
    %v494 = vadd.f32 %v294, %v475
    %v495 = vadd.f32 %v295, %v477
    %v496 = vadd.f32 %v296, %v479
    %v497 = vadd.f32 %v297, %v481
    %s498 = sld [smem:[#allocation2 + $0x3]]
    %v499 = vstv %s498
    %v500 = vmul.f32 %v499, %v49
    %v501 = vmul.f32 %v499, %v50
    %v502 = vmul.f32 %v499, %v51
    %v503 = vmul.f32 %v499, %v52
    %v504 = vmul.f32 %v499, %v53
    %v505 = vmul.f32 %v499, %v54
    %v506 = vmul.f32 %v499, %v55
    %v507 = vmul.f32 %v499, %v56
    %v508 = vadd.f32 %v340, %v500
    %v509 = vadd.f32 %v341, %v501
    %v510 = vadd.f32 %v342, %v502
    %v511 = vadd.f32 %v343, %v503
    %v512 = vadd.f32 %v344, %v504
    %v513 = vadd.f32 %v345, %v505
    %v514 = vadd.f32 %v346, %v506
    %v515 = vadd.f32 %v347, %v507
    %s516 = sld [smem:[#allocation2 + $0xc]]
    %v517 = vstv %s516
    %v518 = vmul.f32 %v517, %v49
    %v519 = vmul.f32 %v517, %v50
    %v520 = vmul.f32 %v517, %v51
    %v521 = vmul.f32 %v517, %v52
    %v522 = vmul.f32 %v517, %v53
    %v523 = vmul.f32 %v517, %v54
    %v524 = vmul.f32 %v517, %v55
    %v525 = vmul.f32 %v517, %v56
    %v526 = vadd.f32 %v390, %v518
    %v527 = vadd.f32 %v391, %v519
    %v528 = vadd.f32 %v392, %v520
    %v529 = vadd.f32 %v393, %v521
    %v530 = vadd.f32 %v394, %v522
    %v531 = vadd.f32 %v395, %v523
    %v532 = vadd.f32 %v396, %v524
    %v533 = vadd.f32 %v397, %v525
    %s534 = sld [smem:[#allocation2 + $0x15]]
    %v535 = vstv %s534
    %v536 = vmul.f32 %v535, %v49
    %v537 = vmul.f32 %v535, %v50
    %v538 = vmul.f32 %v535, %v51
    %v539 = vmul.f32 %v535, %v52
    %v540 = vmul.f32 %v535, %v53
    %v541 = vmul.f32 %v535, %v54
    %v542 = vmul.f32 %v535, %v55
    %v543 = vmul.f32 %v535, %v56
    %v544 = vadd.f32 %v440, %v536
    %v545 = vadd.f32 %v441, %v537
    %v546 = vadd.f32 %v442, %v538
    %v547 = vadd.f32 %v443, %v539
    %v548 = vadd.f32 %v444, %v540
    %v549 = vadd.f32 %v445, %v541
    %v550 = vadd.f32 %v446, %v542
    %v551 = vadd.f32 %v447, %v543
    %s552 = sld [smem:[#allocation2 + $0x1e]]
    %v553 = vstv %s552
    %v554 = vmul.f32 %v553, %v49
    %v555 = vmul.f32 %v553, %v50
    %v556 = vmul.f32 %v553, %v51
    %v557 = vmul.f32 %v553, %v52
    %v558 = vmul.f32 %v553, %v53
    %v559 = vmul.f32 %v553, %v54
    %v560 = vmul.f32 %v553, %v55
    %v561 = vmul.f32 %v553, %v56
    %v562 = vadd.f32 %v490, %v554
    %v563 = vadd.f32 %v491, %v555
    %v564 = vadd.f32 %v492, %v556
    %v565 = vadd.f32 %v493, %v557
    %v566 = vadd.f32 %v494, %v558
    %v567 = vadd.f32 %v495, %v559
    %v568 = vadd.f32 %v496, %v560
    %v569 = vadd.f32 %v497, %v561
    %s570 = sld [smem:[#allocation2 + $0x4]]
    %v571 = vstv %s570
    %v572 = vmul.f32 %v571, %v49
    %v573 = vmul.f32 %v571, %v50
    %v574 = vmul.f32 %v571, %v51
    %v575 = vmul.f32 %v571, %v52
    %v576 = vmul.f32 %v571, %v53
    %v577 = vmul.f32 %v571, %v54
    %v578 = vmul.f32 %v571, %v55
    %v579 = vmul.f32 %v571, %v56
    %588 = vrot.lane.b32.xlu0 %v572, 127
    %v589 = vpop.permute.xlu0 %588
    %590 = vrot.lane.b32.xlu0 %v573, 127
    %v591 = vpop.permute.xlu0 %590
    %592 = vrot.lane.b32.xlu0 %v574, 127
    %v593 = vpop.permute.xlu0 %592
    %594 = vrot.lane.b32.xlu0 %v575, 127
    %v595 = vpop.permute.xlu0 %594
    %596 = vrot.lane.b32.xlu0 %v576, 127
    %v597 = vpop.permute.xlu0 %596
    %598 = vrot.lane.b32.xlu0 %v577, 127
    %v599 = vpop.permute.xlu0 %598
    %600 = vrot.lane.b32.xlu0 %v578, 127
    %v601 = vpop.permute.xlu0 %600
    %602 = vrot.lane.b32.xlu0 %v579, 127
    %v603 = vpop.permute.xlu0 %602
    %v612 = vadd.f32 %v508, %v589
    %v613 = vadd.f32 %v509, %v591
    %v614 = vadd.f32 %v510, %v593
    %v615 = vadd.f32 %v511, %v595
    %v616 = vadd.f32 %v512, %v597
    %v617 = vadd.f32 %v513, %v599
    %v618 = vadd.f32 %v514, %v601
    %v619 = vadd.f32 %v515, %v603
    %s620 = sld [smem:[#allocation2 + $0xd]]
    %v621 = vstv %s620
    %v622 = vmul.f32 %v621, %v49
    %v623 = vmul.f32 %v621, %v50
    %v624 = vmul.f32 %v621, %v51
    %v625 = vmul.f32 %v621, %v52
    %v626 = vmul.f32 %v621, %v53
    %v627 = vmul.f32 %v621, %v54
    %v628 = vmul.f32 %v621, %v55
    %v629 = vmul.f32 %v621, %v56
    %638 = vrot.lane.b32.xlu0 %v622, 127
    %v639 = vpop.permute.xlu0 %638
    %640 = vrot.lane.b32.xlu0 %v623, 127
    %v641 = vpop.permute.xlu0 %640
    %642 = vrot.lane.b32.xlu0 %v624, 127
    %v643 = vpop.permute.xlu0 %642
    %644 = vrot.lane.b32.xlu0 %v625, 127
    %v645 = vpop.permute.xlu0 %644
    %646 = vrot.lane.b32.xlu0 %v626, 127
    %v647 = vpop.permute.xlu0 %646
    %648 = vrot.lane.b32.xlu0 %v627, 127
    %v649 = vpop.permute.xlu0 %648
    %650 = vrot.lane.b32.xlu0 %v628, 127
    %v651 = vpop.permute.xlu0 %650
    %652 = vrot.lane.b32.xlu0 %v629, 127
    %v653 = vpop.permute.xlu0 %652
    %v662 = vadd.f32 %v526, %v639
    %v663 = vadd.f32 %v527, %v641
    %v664 = vadd.f32 %v528, %v643
    %v665 = vadd.f32 %v529, %v645
    %v666 = vadd.f32 %v530, %v647
    %v667 = vadd.f32 %v531, %v649
    %v668 = vadd.f32 %v532, %v651
    %v669 = vadd.f32 %v533, %v653
    %s670 = sld [smem:[#allocation2 + $0x16]]
    %v671 = vstv %s670
    %v672 = vmul.f32 %v671, %v49
    %v673 = vmul.f32 %v671, %v50
    %v674 = vmul.f32 %v671, %v51
    %v675 = vmul.f32 %v671, %v52
    %v676 = vmul.f32 %v671, %v53
    %v677 = vmul.f32 %v671, %v54
    %v678 = vmul.f32 %v671, %v55
    %v679 = vmul.f32 %v671, %v56
    %688 = vrot.lane.b32.xlu0 %v672, 127
    %v689 = vpop.permute.xlu0 %688
    %690 = vrot.lane.b32.xlu0 %v673, 127
    %v691 = vpop.permute.xlu0 %690
    %692 = vrot.lane.b32.xlu0 %v674, 127
    %v693 = vpop.permute.xlu0 %692
    %694 = vrot.lane.b32.xlu0 %v675, 127
    %v695 = vpop.permute.xlu0 %694
    %696 = vrot.lane.b32.xlu0 %v676, 127
    %v697 = vpop.permute.xlu0 %696
    %698 = vrot.lane.b32.xlu0 %v677, 127
    %v699 = vpop.permute.xlu0 %698
    %700 = vrot.lane.b32.xlu0 %v678, 127
    %v701 = vpop.permute.xlu0 %700
    %702 = vrot.lane.b32.xlu0 %v679, 127
    %v703 = vpop.permute.xlu0 %702
    %v712 = vadd.f32 %v544, %v689
    %v713 = vadd.f32 %v545, %v691
    %v714 = vadd.f32 %v546, %v693
    %v715 = vadd.f32 %v547, %v695
    %v716 = vadd.f32 %v548, %v697
    %v717 = vadd.f32 %v549, %v699
    %v718 = vadd.f32 %v550, %v701
    %v719 = vadd.f32 %v551, %v703
    %s720 = sld [smem:[#allocation2 + $0x1f]]
    %v721 = vstv %s720
    %v722 = vmul.f32 %v721, %v49
    %v723 = vmul.f32 %v721, %v50
    %v724 = vmul.f32 %v721, %v51
    %v725 = vmul.f32 %v721, %v52
    %v726 = vmul.f32 %v721, %v53
    %v727 = vmul.f32 %v721, %v54
    %v728 = vmul.f32 %v721, %v55
    %v729 = vmul.f32 %v721, %v56
    %738 = vrot.lane.b32.xlu0 %v722, 127
    %v739 = vpop.permute.xlu0 %738
    %740 = vrot.lane.b32.xlu0 %v723, 127
    %v741 = vpop.permute.xlu0 %740
    %742 = vrot.lane.b32.xlu0 %v724, 127
    %v743 = vpop.permute.xlu0 %742
    %744 = vrot.lane.b32.xlu0 %v725, 127
    %v745 = vpop.permute.xlu0 %744
    %746 = vrot.lane.b32.xlu0 %v726, 127
    %v747 = vpop.permute.xlu0 %746
    %748 = vrot.lane.b32.xlu0 %v727, 127
    %v749 = vpop.permute.xlu0 %748
    %750 = vrot.lane.b32.xlu0 %v728, 127
    %v751 = vpop.permute.xlu0 %750
    %752 = vrot.lane.b32.xlu0 %v729, 127
    %v753 = vpop.permute.xlu0 %752
    %v762 = vadd.f32 %v562, %v739
    %v763 = vadd.f32 %v563, %v741
    %v764 = vadd.f32 %v564, %v743
    %v765 = vadd.f32 %v565, %v745
    %v766 = vadd.f32 %v566, %v747
    %v767 = vadd.f32 %v567, %v749
    %v768 = vadd.f32 %v568, %v751
    %v769 = vadd.f32 %v569, %v753
    %s770 = sld [smem:[#allocation2 + $0x5]]
    %v771 = vstv %s770
    %v772 = vmul.f32 %v771, %v49
    %v773 = vmul.f32 %v771, %v50
    %v774 = vmul.f32 %v771, %v51
    %v775 = vmul.f32 %v771, %v52
    %v776 = vmul.f32 %v771, %v53
    %v777 = vmul.f32 %v771, %v54
    %v778 = vmul.f32 %v771, %v55
    %v779 = vmul.f32 %v771, %v56
    %788 = vrot.lane.b32.xlu0 %v772, 126
    %v789 = vpop.permute.xlu0 %788
    %790 = vrot.lane.b32.xlu0 %v773, 126
    %v791 = vpop.permute.xlu0 %790
    %792 = vrot.lane.b32.xlu0 %v774, 126
    %v793 = vpop.permute.xlu0 %792
    %794 = vrot.lane.b32.xlu0 %v775, 126
    %v795 = vpop.permute.xlu0 %794
    %796 = vrot.lane.b32.xlu0 %v776, 126
    %v797 = vpop.permute.xlu0 %796
    %798 = vrot.lane.b32.xlu0 %v777, 126
    %v799 = vpop.permute.xlu0 %798
    %800 = vrot.lane.b32.xlu0 %v778, 126
    %v801 = vpop.permute.xlu0 %800
    %802 = vrot.lane.b32.xlu0 %v779, 126
    %v803 = vpop.permute.xlu0 %802
    %v812 = vadd.f32 %v612, %v789
    %v813 = vadd.f32 %v613, %v791
    %v814 = vadd.f32 %v614, %v793
    %v815 = vadd.f32 %v615, %v795
    %v816 = vadd.f32 %v616, %v797
    %v817 = vadd.f32 %v617, %v799
    %v818 = vadd.f32 %v618, %v801
    %v819 = vadd.f32 %v619, %v803
    %s820 = sld [smem:[#allocation2 + $0xe]]
    %v821 = vstv %s820
    %v822 = vmul.f32 %v821, %v49
    %v823 = vmul.f32 %v821, %v50
    %v824 = vmul.f32 %v821, %v51
    %v825 = vmul.f32 %v821, %v52
    %v826 = vmul.f32 %v821, %v53
    %v827 = vmul.f32 %v821, %v54
    %v828 = vmul.f32 %v821, %v55
    %v829 = vmul.f32 %v821, %v56
    %838 = vrot.lane.b32.xlu0 %v822, 126
    %v839 = vpop.permute.xlu0 %838
    %840 = vrot.lane.b32.xlu0 %v823, 126
    %v841 = vpop.permute.xlu0 %840
    %842 = vrot.lane.b32.xlu0 %v824, 126
    %v843 = vpop.permute.xlu0 %842
    %844 = vrot.lane.b32.xlu0 %v825, 126
    %v845 = vpop.permute.xlu0 %844
    %846 = vrot.lane.b32.xlu0 %v826, 126
    %v847 = vpop.permute.xlu0 %846
    %848 = vrot.lane.b32.xlu0 %v827, 126
    %v849 = vpop.permute.xlu0 %848
    %850 = vrot.lane.b32.xlu0 %v828, 126
    %v851 = vpop.permute.xlu0 %850
    %852 = vrot.lane.b32.xlu0 %v829, 126
    %v853 = vpop.permute.xlu0 %852
    %v862 = vadd.f32 %v662, %v839
    %v863 = vadd.f32 %v663, %v841
    %v864 = vadd.f32 %v664, %v843
    %v865 = vadd.f32 %v665, %v845
    %v866 = vadd.f32 %v666, %v847
    %v867 = vadd.f32 %v667, %v849
    %v868 = vadd.f32 %v668, %v851
    %v869 = vadd.f32 %v669, %v853
    %s870 = sld [smem:[#allocation2 + $0x17]]
    %v871 = vstv %s870
    %v872 = vmul.f32 %v871, %v49
    %v873 = vmul.f32 %v871, %v50
    %v874 = vmul.f32 %v871, %v51
    %v875 = vmul.f32 %v871, %v52
    %v876 = vmul.f32 %v871, %v53
    %v877 = vmul.f32 %v871, %v54
    %v878 = vmul.f32 %v871, %v55
    %v879 = vmul.f32 %v871, %v56
    %888 = vrot.lane.b32.xlu0 %v872, 126
    %v889 = vpop.permute.xlu0 %888
    %890 = vrot.lane.b32.xlu0 %v873, 126
    %v891 = vpop.permute.xlu0 %890
    %892 = vrot.lane.b32.xlu0 %v874, 126
    %v893 = vpop.permute.xlu0 %892
    %894 = vrot.lane.b32.xlu0 %v875, 126
    %v895 = vpop.permute.xlu0 %894
    %896 = vrot.lane.b32.xlu0 %v876, 126
    %v897 = vpop.permute.xlu0 %896
    %898 = vrot.lane.b32.xlu0 %v877, 126
    %v899 = vpop.permute.xlu0 %898
    %900 = vrot.lane.b32.xlu0 %v878, 126
    %v901 = vpop.permute.xlu0 %900
    %902 = vrot.lane.b32.xlu0 %v879, 126
    %v903 = vpop.permute.xlu0 %902
    %v912 = vadd.f32 %v712, %v889
    %v913 = vadd.f32 %v713, %v891
    %v914 = vadd.f32 %v714, %v893
    %v915 = vadd.f32 %v715, %v895
    %v916 = vadd.f32 %v716, %v897
    %v917 = vadd.f32 %v717, %v899
    %v918 = vadd.f32 %v718, %v901
    %v919 = vadd.f32 %v719, %v903
    %s920 = sld [smem:[#allocation2 + $0x20]]
    %v921 = vstv %s920
    %v922 = vmul.f32 %v921, %v49
    %v923 = vmul.f32 %v921, %v50
    %v924 = vmul.f32 %v921, %v51
    %v925 = vmul.f32 %v921, %v52
    %v926 = vmul.f32 %v921, %v53
    %v927 = vmul.f32 %v921, %v54
    %v928 = vmul.f32 %v921, %v55
    %v929 = vmul.f32 %v921, %v56
    %938 = vrot.lane.b32.xlu0 %v922, 126
    %v939 = vpop.permute.xlu0 %938
    %940 = vrot.lane.b32.xlu0 %v923, 126
    %v941 = vpop.permute.xlu0 %940
    %942 = vrot.lane.b32.xlu0 %v924, 126
    %v943 = vpop.permute.xlu0 %942
    %944 = vrot.lane.b32.xlu0 %v925, 126
    %v945 = vpop.permute.xlu0 %944
    %946 = vrot.lane.b32.xlu0 %v926, 126
    %v947 = vpop.permute.xlu0 %946
    %948 = vrot.lane.b32.xlu0 %v927, 126
    %v949 = vpop.permute.xlu0 %948
    %950 = vrot.lane.b32.xlu0 %v928, 126
    %v951 = vpop.permute.xlu0 %950
    %952 = vrot.lane.b32.xlu0 %v929, 126
    %v953 = vpop.permute.xlu0 %952
    %v962 = vadd.f32 %v762, %v939
    %v963 = vadd.f32 %v763, %v941
    %v964 = vadd.f32 %v764, %v943
    %v965 = vadd.f32 %v765, %v945
    %v966 = vadd.f32 %v766, %v947
    %v967 = vadd.f32 %v767, %v949
    %v968 = vadd.f32 %v768, %v951
    %v969 = vadd.f32 %v769, %v953
    %s970 = sld [smem:[#allocation2 + $0x6]]
    %v971 = vstv %s970
    %v972 = vmul.f32 %v971, %v50
    %v973 = vmul.f32 %v971, %v51
    %v974 = vmul.f32 %v971, %v52
    %v975 = vmul.f32 %v971, %v53
    %v976 = vmul.f32 %v971, %v54
    %v977 = vmul.f32 %v971, %v55
    %v978 = vmul.f32 %v971, %v56
    %v979 = vmul.f32 %v971, %v57
    %v980 = vadd.f32 %v812, %v972
    %v981 = vadd.f32 %v813, %v973
    %v982 = vadd.f32 %v814, %v974
    %v983 = vadd.f32 %v815, %v975
    %v984 = vadd.f32 %v816, %v976
    %v985 = vadd.f32 %v817, %v977
    %v986 = vadd.f32 %v818, %v978
    %v987 = vadd.f32 %v819, %v979
    %s988 = sld [smem:[#allocation2 + $0xf]]
    %v989 = vstv %s988
    %v990 = vmul.f32 %v989, %v50
    %v991 = vmul.f32 %v989, %v51
    %v992 = vmul.f32 %v989, %v52
    %v993 = vmul.f32 %v989, %v53
    %v994 = vmul.f32 %v989, %v54
    %v995 = vmul.f32 %v989, %v55
    %v996 = vmul.f32 %v989, %v56
    %v997 = vmul.f32 %v989, %v57
    %v998 = vadd.f32 %v862, %v990
    %v999 = vadd.f32 %v863, %v991
    %v1000 = vadd.f32 %v864, %v992
    %v1001 = vadd.f32 %v865, %v993
    %v1002 = vadd.f32 %v866, %v994
    %v1003 = vadd.f32 %v867, %v995
    %v1004 = vadd.f32 %v868, %v996
    %v1005 = vadd.f32 %v869, %v997
    %s1006 = sld [smem:[#allocation2 + $0x18]]
    %v1007 = vstv %s1006
    %v1008 = vmul.f32 %v1007, %v50
    %v1009 = vmul.f32 %v1007, %v51
    %v1010 = vmul.f32 %v1007, %v52
    %v1011 = vmul.f32 %v1007, %v53
    %v1012 = vmul.f32 %v1007, %v54
    %v1013 = vmul.f32 %v1007, %v55
    %v1014 = vmul.f32 %v1007, %v56
    %v1015 = vmul.f32 %v1007, %v57
    %v1016 = vadd.f32 %v912, %v1008
    %v1017 = vadd.f32 %v913, %v1009
    %v1018 = vadd.f32 %v914, %v1010
    %v1019 = vadd.f32 %v915, %v1011
    %v1020 = vadd.f32 %v916, %v1012
    %v1021 = vadd.f32 %v917, %v1013
    %v1022 = vadd.f32 %v918, %v1014
    %v1023 = vadd.f32 %v919, %v1015
    %s1024 = sld [smem:[#allocation2 + $0x21]]
    %v1025 = vstv %s1024
    %v1026 = vmul.f32 %v1025, %v50
    %v1027 = vmul.f32 %v1025, %v51
    %v1028 = vmul.f32 %v1025, %v52
    %v1029 = vmul.f32 %v1025, %v53
    %v1030 = vmul.f32 %v1025, %v54
    %v1031 = vmul.f32 %v1025, %v55
    %v1032 = vmul.f32 %v1025, %v56
    %v1033 = vmul.f32 %v1025, %v57
    %v1034 = vadd.f32 %v962, %v1026
    %v1035 = vadd.f32 %v963, %v1027
    %v1036 = vadd.f32 %v964, %v1028
    %v1037 = vadd.f32 %v965, %v1029
    %v1038 = vadd.f32 %v966, %v1030
    %v1039 = vadd.f32 %v967, %v1031
    %v1040 = vadd.f32 %v968, %v1032
    %v1041 = vadd.f32 %v969, %v1033
    %s1042 = sld [smem:[#allocation2 + $0x7]]
    %v1043 = vstv %s1042
    %v1044 = vmul.f32 %v1043, %v50
    %v1045 = vmul.f32 %v1043, %v51
    %v1046 = vmul.f32 %v1043, %v52
    %v1047 = vmul.f32 %v1043, %v53
    %v1048 = vmul.f32 %v1043, %v54
    %v1049 = vmul.f32 %v1043, %v55
    %v1050 = vmul.f32 %v1043, %v56
    %v1051 = vmul.f32 %v1043, %v57
    %1060 = vrot.lane.b32.xlu0 %v1044, 127
    %v1061 = vpop.permute.xlu0 %1060
    %1062 = vrot.lane.b32.xlu0 %v1045, 127
    %v1063 = vpop.permute.xlu0 %1062
    %1064 = vrot.lane.b32.xlu0 %v1046, 127
    %v1065 = vpop.permute.xlu0 %1064
    %1066 = vrot.lane.b32.xlu0 %v1047, 127
    %v1067 = vpop.permute.xlu0 %1066
    %1068 = vrot.lane.b32.xlu0 %v1048, 127
    %v1069 = vpop.permute.xlu0 %1068
    %1070 = vrot.lane.b32.xlu0 %v1049, 127
    %v1071 = vpop.permute.xlu0 %1070
    %1072 = vrot.lane.b32.xlu0 %v1050, 127
    %v1073 = vpop.permute.xlu0 %1072
    %1074 = vrot.lane.b32.xlu0 %v1051, 127
    %v1075 = vpop.permute.xlu0 %1074
    %v1084 = vadd.f32 %v980, %v1061
    %v1085 = vadd.f32 %v981, %v1063
    %v1086 = vadd.f32 %v982, %v1065
    %v1087 = vadd.f32 %v983, %v1067
    %v1088 = vadd.f32 %v984, %v1069
    %v1089 = vadd.f32 %v985, %v1071
    %v1090 = vadd.f32 %v986, %v1073
    %v1091 = vadd.f32 %v987, %v1075
    %s1092 = sld [smem:[#allocation2 + $0x10]]
    %v1093 = vstv %s1092
    %v1094 = vmul.f32 %v1093, %v50
    %v1095 = vmul.f32 %v1093, %v51
    %v1096 = vmul.f32 %v1093, %v52
    %v1097 = vmul.f32 %v1093, %v53
    %v1098 = vmul.f32 %v1093, %v54
    %v1099 = vmul.f32 %v1093, %v55
    %v1100 = vmul.f32 %v1093, %v56
    %v1101 = vmul.f32 %v1093, %v57
    %1110 = vrot.lane.b32.xlu0 %v1094, 127
    %v1111 = vpop.permute.xlu0 %1110
    %1112 = vrot.lane.b32.xlu0 %v1095, 127
    %v1113 = vpop.permute.xlu0 %1112
    %1114 = vrot.lane.b32.xlu0 %v1096, 127
    %v1115 = vpop.permute.xlu0 %1114
    %1116 = vrot.lane.b32.xlu0 %v1097, 127
    %v1117 = vpop.permute.xlu0 %1116
    %1118 = vrot.lane.b32.xlu0 %v1098, 127
    %v1119 = vpop.permute.xlu0 %1118
    %1120 = vrot.lane.b32.xlu0 %v1099, 127
    %v1121 = vpop.permute.xlu0 %1120
    %1122 = vrot.lane.b32.xlu0 %v1100, 127
    %v1123 = vpop.permute.xlu0 %1122
    %1124 = vrot.lane.b32.xlu0 %v1101, 127
    %v1125 = vpop.permute.xlu0 %1124
    %v1134 = vadd.f32 %v998, %v1111
    %v1135 = vadd.f32 %v999, %v1113
    %v1136 = vadd.f32 %v1000, %v1115
    %v1137 = vadd.f32 %v1001, %v1117
    %v1138 = vadd.f32 %v1002, %v1119
    %v1139 = vadd.f32 %v1003, %v1121
    %v1140 = vadd.f32 %v1004, %v1123
    %v1141 = vadd.f32 %v1005, %v1125
    %s1142 = sld [smem:[#allocation2 + $0x19]]
    %v1143 = vstv %s1142
    %v1144 = vmul.f32 %v1143, %v50
    %v1145 = vmul.f32 %v1143, %v51
    %v1146 = vmul.f32 %v1143, %v52
    %v1147 = vmul.f32 %v1143, %v53
    %v1148 = vmul.f32 %v1143, %v54
    %v1149 = vmul.f32 %v1143, %v55
    %v1150 = vmul.f32 %v1143, %v56
    %v1151 = vmul.f32 %v1143, %v57
    %1160 = vrot.lane.b32.xlu0 %v1144, 127
    %v1161 = vpop.permute.xlu0 %1160
    %1162 = vrot.lane.b32.xlu0 %v1145, 127
    %v1163 = vpop.permute.xlu0 %1162
    %1164 = vrot.lane.b32.xlu0 %v1146, 127
    %v1165 = vpop.permute.xlu0 %1164
    %1166 = vrot.lane.b32.xlu0 %v1147, 127
    %v1167 = vpop.permute.xlu0 %1166
    %1168 = vrot.lane.b32.xlu0 %v1148, 127
    %v1169 = vpop.permute.xlu0 %1168
    %1170 = vrot.lane.b32.xlu0 %v1149, 127
    %v1171 = vpop.permute.xlu0 %1170
    %1172 = vrot.lane.b32.xlu0 %v1150, 127
    %v1173 = vpop.permute.xlu0 %1172
    %1174 = vrot.lane.b32.xlu0 %v1151, 127
    %v1175 = vpop.permute.xlu0 %1174
    %v1184 = vadd.f32 %v1016, %v1161
    %v1185 = vadd.f32 %v1017, %v1163
    %v1186 = vadd.f32 %v1018, %v1165
    %v1187 = vadd.f32 %v1019, %v1167
    %v1188 = vadd.f32 %v1020, %v1169
    %v1189 = vadd.f32 %v1021, %v1171
    %v1190 = vadd.f32 %v1022, %v1173
    %v1191 = vadd.f32 %v1023, %v1175
    %s1192 = sld [smem:[#allocation2 + $0x22]]
    %v1193 = vstv %s1192
    %v1194 = vmul.f32 %v1193, %v50
    %v1195 = vmul.f32 %v1193, %v51
    %v1196 = vmul.f32 %v1193, %v52
    %v1197 = vmul.f32 %v1193, %v53
    %v1198 = vmul.f32 %v1193, %v54
    %v1199 = vmul.f32 %v1193, %v55
    %v1200 = vmul.f32 %v1193, %v56
    %v1201 = vmul.f32 %v1193, %v57
    %1210 = vrot.lane.b32.xlu0 %v1194, 127
    %v1211 = vpop.permute.xlu0 %1210
    %1212 = vrot.lane.b32.xlu0 %v1195, 127
    %v1213 = vpop.permute.xlu0 %1212
    %1214 = vrot.lane.b32.xlu0 %v1196, 127
    %v1215 = vpop.permute.xlu0 %1214
    %1216 = vrot.lane.b32.xlu0 %v1197, 127
    %v1217 = vpop.permute.xlu0 %1216
    %1218 = vrot.lane.b32.xlu0 %v1198, 127
    %v1219 = vpop.permute.xlu0 %1218
    %1220 = vrot.lane.b32.xlu0 %v1199, 127
    %v1221 = vpop.permute.xlu0 %1220
    %1222 = vrot.lane.b32.xlu0 %v1200, 127
    %v1223 = vpop.permute.xlu0 %1222
    %1224 = vrot.lane.b32.xlu0 %v1201, 127
    %v1225 = vpop.permute.xlu0 %1224
    %v1234 = vadd.f32 %v1034, %v1211
    %v1235 = vadd.f32 %v1035, %v1213
    %v1236 = vadd.f32 %v1036, %v1215
    %v1237 = vadd.f32 %v1037, %v1217
    %v1238 = vadd.f32 %v1038, %v1219
    %v1239 = vadd.f32 %v1039, %v1221
    %v1240 = vadd.f32 %v1040, %v1223
    %v1241 = vadd.f32 %v1041, %v1225
    %s1242 = sld [smem:[#allocation2 + $0x8]]
    %v1243 = vstv %s1242
    %v1244 = vmul.f32 %v1243, %v50
    %v1245 = vmul.f32 %v1243, %v51
    %v1246 = vmul.f32 %v1243, %v52
    %v1247 = vmul.f32 %v1243, %v53
    %v1248 = vmul.f32 %v1243, %v54
    %v1249 = vmul.f32 %v1243, %v55
    %v1250 = vmul.f32 %v1243, %v56
    %v1251 = vmul.f32 %v1243, %v57
    %1260 = vrot.lane.b32.xlu0 %v1244, 126
    %v1261 = vpop.permute.xlu0 %1260
    %1262 = vrot.lane.b32.xlu0 %v1245, 126
    %v1263 = vpop.permute.xlu0 %1262
    %1264 = vrot.lane.b32.xlu0 %v1246, 126
    %v1265 = vpop.permute.xlu0 %1264
    %1266 = vrot.lane.b32.xlu0 %v1247, 126
    %v1267 = vpop.permute.xlu0 %1266
    %1268 = vrot.lane.b32.xlu0 %v1248, 126
    %v1269 = vpop.permute.xlu0 %1268
    %1270 = vrot.lane.b32.xlu0 %v1249, 126
    %v1271 = vpop.permute.xlu0 %1270
    %1272 = vrot.lane.b32.xlu0 %v1250, 126
    %v1273 = vpop.permute.xlu0 %1272
    %1274 = vrot.lane.b32.xlu0 %v1251, 126
    %v1275 = vpop.permute.xlu0 %1274
    %v1284 = vadd.f32 %v1084, %v1261
    %v1285 = vadd.f32 %v1085, %v1263
    %v1286 = vadd.f32 %v1086, %v1265
    %v1287 = vadd.f32 %v1087, %v1267
    %v1288 = vadd.f32 %v1088, %v1269
    %v1289 = vadd.f32 %v1089, %v1271
    %v1290 = vadd.f32 %v1090, %v1273
    %v1291 = vadd.f32 %v1091, %v1275
    %s1292 = sld [smem:[#allocation2 + $0x11]]
    %v1293 = vstv %s1292
    %v1294 = vmul.f32 %v1293, %v50
    %v1295 = vmul.f32 %v1293, %v51
    %v1296 = vmul.f32 %v1293, %v52
    %v1297 = vmul.f32 %v1293, %v53
    %v1298 = vmul.f32 %v1293, %v54
    %v1299 = vmul.f32 %v1293, %v55
    %v1300 = vmul.f32 %v1293, %v56
    %v1301 = vmul.f32 %v1293, %v57
    %1310 = vrot.lane.b32.xlu0 %v1294, 126
    %v1311 = vpop.permute.xlu0 %1310
    %1312 = vrot.lane.b32.xlu0 %v1295, 126
    %v1313 = vpop.permute.xlu0 %1312
    %1314 = vrot.lane.b32.xlu0 %v1296, 126
    %v1315 = vpop.permute.xlu0 %1314
    %1316 = vrot.lane.b32.xlu0 %v1297, 126
    %v1317 = vpop.permute.xlu0 %1316
    %1318 = vrot.lane.b32.xlu0 %v1298, 126
    %v1319 = vpop.permute.xlu0 %1318
    %1320 = vrot.lane.b32.xlu0 %v1299, 126
    %v1321 = vpop.permute.xlu0 %1320
    %1322 = vrot.lane.b32.xlu0 %v1300, 126
    %v1323 = vpop.permute.xlu0 %1322
    %1324 = vrot.lane.b32.xlu0 %v1301, 126
    %v1325 = vpop.permute.xlu0 %1324
    %v1334 = vadd.f32 %v1134, %v1311
    %v1335 = vadd.f32 %v1135, %v1313
    %v1336 = vadd.f32 %v1136, %v1315
    %v1337 = vadd.f32 %v1137, %v1317
    %v1338 = vadd.f32 %v1138, %v1319
    %v1339 = vadd.f32 %v1139, %v1321
    %v1340 = vadd.f32 %v1140, %v1323
    %v1341 = vadd.f32 %v1141, %v1325
    %s1342 = sld [smem:[#allocation2 + $0x1a]]
    %v1343 = vstv %s1342
    %v1344 = vmul.f32 %v1343, %v50
    %v1345 = vmul.f32 %v1343, %v51
    %v1346 = vmul.f32 %v1343, %v52
    %v1347 = vmul.f32 %v1343, %v53
    %v1348 = vmul.f32 %v1343, %v54
    %v1349 = vmul.f32 %v1343, %v55
    %v1350 = vmul.f32 %v1343, %v56
    %v1351 = vmul.f32 %v1343, %v57
    %1360 = vrot.lane.b32.xlu0 %v1344, 126
    %v1361 = vpop.permute.xlu0 %1360
    %1362 = vrot.lane.b32.xlu0 %v1345, 126
    %v1363 = vpop.permute.xlu0 %1362
    %1364 = vrot.lane.b32.xlu0 %v1346, 126
    %v1365 = vpop.permute.xlu0 %1364
    %1366 = vrot.lane.b32.xlu0 %v1347, 126
    %v1367 = vpop.permute.xlu0 %1366
    %1368 = vrot.lane.b32.xlu0 %v1348, 126
    %v1369 = vpop.permute.xlu0 %1368
    %1370 = vrot.lane.b32.xlu0 %v1349, 126
    %v1371 = vpop.permute.xlu0 %1370
    %1372 = vrot.lane.b32.xlu0 %v1350, 126
    %v1373 = vpop.permute.xlu0 %1372
    %1374 = vrot.lane.b32.xlu0 %v1351, 126
    %v1375 = vpop.permute.xlu0 %1374
    %v1384 = vadd.f32 %v1184, %v1361
    %v1385 = vadd.f32 %v1185, %v1363
    %v1386 = vadd.f32 %v1186, %v1365
    %v1387 = vadd.f32 %v1187, %v1367
    %v1388 = vadd.f32 %v1188, %v1369
    %v1389 = vadd.f32 %v1189, %v1371
    %v1390 = vadd.f32 %v1190, %v1373
    %v1391 = vadd.f32 %v1191, %v1375
    %s1392 = sld [smem:[#allocation2 + $0x23]]
    %v1393 = vstv %s1392
    %v1394 = vmul.f32 %v1393, %v50
    %v1395 = vmul.f32 %v1393, %v51
    %v1396 = vmul.f32 %v1393, %v52
    %v1397 = vmul.f32 %v1393, %v53
    %v1398 = vmul.f32 %v1393, %v54
    %v1399 = vmul.f32 %v1393, %v55
    %v1400 = vmul.f32 %v1393, %v56
    %v1401 = vmul.f32 %v1393, %v57
    %1410 = vrot.lane.b32.xlu0 %v1394, 126
    %v1411 = vpop.permute.xlu0 %1410
    %1412 = vrot.lane.b32.xlu0 %v1395, 126
    %v1413 = vpop.permute.xlu0 %1412
    %1414 = vrot.lane.b32.xlu0 %v1396, 126
    %v1415 = vpop.permute.xlu0 %1414
    %1416 = vrot.lane.b32.xlu0 %v1397, 126
    %v1417 = vpop.permute.xlu0 %1416
    %1418 = vrot.lane.b32.xlu0 %v1398, 126
    %v1419 = vpop.permute.xlu0 %1418
    %1420 = vrot.lane.b32.xlu0 %v1399, 126
    %v1421 = vpop.permute.xlu0 %1420
    %1422 = vrot.lane.b32.xlu0 %v1400, 126
    %v1423 = vpop.permute.xlu0 %1422
    %1424 = vrot.lane.b32.xlu0 %v1401, 126
    %v1425 = vpop.permute.xlu0 %1424
    %v1434 = vadd.f32 %v1234, %v1411
    %v1435 = vadd.f32 %v1235, %v1413
    %v1436 = vadd.f32 %v1236, %v1415
    %v1437 = vadd.f32 %v1237, %v1417
    %v1438 = vadd.f32 %v1238, %v1419
    %v1439 = vadd.f32 %v1239, %v1421
    %v1440 = vadd.f32 %v1240, %v1423
    %v1441 = vadd.f32 %v1241, %v1425
    %1450 = vrot.lane.b32.xlu0 %v1334, 14
    %v1451 = vpop.permute.xlu0 %1450
    %1452 = vrot.lane.b32.xlu0 %v1335, 14
    %v1453 = vpop.permute.xlu0 %1452
    %1454 = vrot.lane.b32.xlu0 %v1336, 14
    %v1455 = vpop.permute.xlu0 %1454
    %1456 = vrot.lane.b32.xlu0 %v1337, 14
    %v1457 = vpop.permute.xlu0 %1456
    %1458 = vrot.lane.b32.xlu0 %v1338, 14
    %v1459 = vpop.permute.xlu0 %1458
    %1460 = vrot.lane.b32.xlu0 %v1339, 14
    %v1461 = vpop.permute.xlu0 %1460
    %1462 = vrot.lane.b32.xlu0 %v1340, 14
    %v1463 = vpop.permute.xlu0 %1462
    %1464 = vrot.lane.b32.xlu0 %v1341, 14
    %v1465 = vpop.permute.xlu0 %1464
    %1482 = vrot.lane.b32.xlu0 %v1384, 28
    %v1483 = vpop.permute.xlu0 %1482
    %1484 = vrot.lane.b32.xlu0 %v1385, 28
    %v1485 = vpop.permute.xlu0 %1484
    %1486 = vrot.lane.b32.xlu0 %v1386, 28
    %v1487 = vpop.permute.xlu0 %1486
    %1488 = vrot.lane.b32.xlu0 %v1387, 28
    %v1489 = vpop.permute.xlu0 %1488
    %1490 = vrot.lane.b32.xlu0 %v1388, 28
    %v1491 = vpop.permute.xlu0 %1490
    %1492 = vrot.lane.b32.xlu0 %v1389, 28
    %v1493 = vpop.permute.xlu0 %1492
    %1494 = vrot.lane.b32.xlu0 %v1390, 28
    %v1495 = vpop.permute.xlu0 %1494
    %1496 = vrot.lane.b32.xlu0 %v1391, 28
    %v1497 = vpop.permute.xlu0 %1496
    %1514 = vrot.lane.b32.xlu0 %v1434, 42
    %v1515 = vpop.permute.xlu0 %1514
    %1516 = vrot.lane.b32.xlu0 %v1435, 42
    %v1517 = vpop.permute.xlu0 %1516
    %1518 = vrot.lane.b32.xlu0 %v1436, 42
    %v1519 = vpop.permute.xlu0 %1518
    %1520 = vrot.lane.b32.xlu0 %v1437, 42
    %v1521 = vpop.permute.xlu0 %1520
    %1522 = vrot.lane.b32.xlu0 %v1438, 42
    %v1523 = vpop.permute.xlu0 %1522
    %1524 = vrot.lane.b32.xlu0 %v1439, 42
    %v1525 = vpop.permute.xlu0 %1524
    %1526 = vrot.lane.b32.xlu0 %v1440, 42
    %v1527 = vpop.permute.xlu0 %1526
    %1528 = vrot.lane.b32.xlu0 %v1441, 42
    %v1529 = vpop.permute.xlu0 %1528
    %vm1538 = vcmask 113664
    %v1539 = vsel %vm1538, %v1284, %v1451
    %v1540 = vsel %vm1538, %v1285, %v1453
    %v1541 = vsel %vm1538, %v1286, %v1455
    %v1542 = vsel %vm1538, %v1287, %v1457
    %v1543 = vsel %vm1538, %v1288, %v1459
    %v1544 = vsel %vm1538, %v1289, %v1461
    %v1545 = vsel %vm1538, %v1290, %v1463
    %v1546 = vsel %vm1538, %v1291, %v1465
    %vm1547 = vcmask 228352
    %v1548 = vsel %vm1547, %v1539, %v1483
    %v1549 = vsel %vm1547, %v1540, %v1485
    %v1550 = vsel %vm1547, %v1541, %v1487
    %v1551 = vsel %vm1547, %v1542, %v1489
    %v1552 = vsel %vm1547, %v1543, %v1491
    %v1553 = vsel %vm1547, %v1544, %v1493
    %v1554 = vsel %vm1547, %v1545, %v1495
    %v1555 = vsel %vm1547, %v1546, %v1497
    %vm1556 = vcmask 343040
    %v1557 = vsel %vm1556, %v1548, %v1515
    %v1558 = vsel %vm1556, %v1549, %v1517
    %v1559 = vsel %vm1556, %v1550, %v1519
    %v1560 = vsel %vm1556, %v1551, %v1521
    %v1561 = vsel %vm1556, %v1552, %v1523
    %v1562 = vsel %vm1556, %v1553, %v1525
    %v1563 = vsel %vm1556, %v1554, %v1527
    %v1564 = vsel %vm1556, %v1555, %v1529
    %v1565 = vld [vmem:[%s2] sm:$0x1]
    %v1567 = vlaneseq
    %v1568 = vshrl.u32 %v1567, 7
    %v1569 = vsub.s32 0, %v1568
    %v1570 = vrot.slane %v1565, %v1569
    %v1572 = vadd.f32 %v1557, %v1570
    %v1573 = vadd.f32 %v1558, %v1570
    %v1574 = vadd.f32 %v1559, %v1570
    %v1575 = vadd.f32 %v1560, %v1570
    %v1576 = vadd.f32 %v1561, %v1570
    %v1577 = vadd.f32 %v1562, %v1570
    %v1578 = vadd.f32 %v1563, %v1570
    %v1579 = vadd.f32 %v1564, %v1570
    %v1580 = vmax.f32 %v1572, 0.0
    %v1581 = vmax.f32 %v1573, 0.0
    %v1582 = vmax.f32 %v1574, 0.0
    %v1583 = vmax.f32 %v1575, 0.0
    %v1584 = vmax.f32 %v1576, 0.0
    %v1585 = vmax.f32 %v1577, 0.0
    %v1586 = vmax.f32 %v1578, 0.0
    %v1587 = vmax.f32 %v1579, 0.0
    %v1588 = vld [vmem:[%s3] sm:$0xff]
    %v1589 = vld [vmem:[%s3 + $0x8] sm:$0xff]
    %v1590 = vld [vmem:[%s3 + $0x10] sm:$0xff]
    %v1591 = vld [vmem:[%s3 + $0x18] sm:$0xff]
    %v1592 = vld [vmem:[%s3 + $0x20] sm:$0xff]
    %v1593 = vld [vmem:[%s3 + $0x28] sm:$0xff]
    %v1594 = vld [vmem:[%s3 + $0x30] sm:$0xff]
    %v1595 = vld [vmem:[%s4] sm:$0x1]
    %v1597 = vlaneseq
    %v1598 = vshrl.u32 %v1597, 7
    %v1599 = vsub.s32 0, %v1598
    %v1600 = vrot.slane %v1595, %v1599
    %vm1602 = vcmask 457728
    %v1604 = vsel %vm1602, %v1580, 0
    %v1607 = vsel %vm1602, %v1581, 0
    %v1610 = vsel %vm1602, %v1582, 0
    %v1613 = vsel %vm1602, %v1583, 0
    %v1616 = vsel %vm1602, %v1584, 0
    %v1619 = vsel %vm1602, %v1585, 0
    %v1622 = vsel %vm1602, %v1586, 0
    %v1625 = vsel %vm1602, %v1587, 0
    %1627 = vmatprep.subr.mxu0 0.0
    %1628 = vmatpush1.msra.mxu0 %v1588
    %1629 = vmatprep.subr.mxu0 0.0
    %1630 = vmatpush1.msra.mxu0 %v1589
    %1631 = vmatprep.subr.mxu0 0.0
    %1632 = vmatpush1.msra.mxu0 %v1590
    %1633 = vmatprep.subr.mxu0 0.0
    %1634 = vmatpush1.msra.mxu0 %v1591
    %1635 = vmatprep.subr.mxu0 0.0
    %1636 = vmatpush1.msra.mxu0 %v1592
    %1637 = vmatprep.subr.mxu0 0.0
    %1638 = vmatpush1.msra.mxu0 %v1593
    %1639 = vmatprep.subr.mxu0 0.0
    %1640 = vmatpush1.msra.mxu0 %v1594
    %1641 = vmatprep.subr.mxu0 0.0
    %1642 = vmatpush1.msra.mxu0 0.0
    %1643 = vmatprep.subr.mxu0 0.0
    %1644 = vmatpush1.msra.mxu0 0.0
    %1645 = vmatprep.subr.mxu0 0.0
    %1646 = vmatpush1.msra.mxu0 0.0
    %1647 = vmatprep.subr.mxu0 0.0
    %1648 = vmatpush1.msra.mxu0 0.0
    %1649 = vmatprep.subr.mxu0 0.0
    %1650 = vmatpush1.msra.mxu0 0.0
    %1651 = vmatprep.subr.mxu0 0.0
    %1652 = vmatpush1.msra.mxu0 0.0
    %1653 = vmatprep.subr.mxu0 0.0
    %1654 = vmatpush1.msra.mxu0 0.0
    %1655 = vmatprep.subr.mxu0 0.0
    %1656 = vmatpush1.msra.mxu0 0.0
    %1657 = vmatprep.subr.mxu0 0.0
    %1658 = vmatpush1.msra.mxu0 0.0
    %1659 = vmatprep.subr.mxu0 0.0
    %1660 = vmatpush1.msra.mxu0 0.0
    %1661 = vmatprep.subr.mxu0 0.0
    %1662 = vmatpush1.msra.mxu0 0.0
    %1663 = vmatprep.subr.mxu0 0.0
    %1664 = vmatpush1.msra.mxu0 0.0
    %1665 = vmatprep.subr.mxu0 0.0
    %1666 = vmatpush1.msra.mxu0 0.0
    %1667 = vmatprep.subr.mxu0 0.0
    %1668 = vmatpush1.msra.mxu0 0.0
    %1669 = vmatprep.subr.mxu0 0.0
    %1670 = vmatpush1.msra.mxu0 0.0
    %1671 = vmatprep.subr.mxu0 0.0
    %1672 = vmatpush1.msra.mxu0 0.0
    %1673 = vmatprep.subr.mxu0 0.0
    %1674 = vmatpush1.msra.mxu0 0.0
    %1675 = vmatprep.subr.mxu0 0.0
    %1676 = vmatpush1.msra.mxu0 0.0
    %1677 = vmatprep.subr.mxu0 0.0
    %1678 = vmatpush1.msra.mxu0 0.0
    %1679 = vmatprep.subr.mxu0 0.0
    %1680 = vmatpush1.msra.mxu0 0.0
    %1681 = vmatprep.subr.mxu0 0.0
    %1682 = vmatpush1.msra.mxu0 0.0
    %1683 = vmatprep.subr.mxu0 0.0
    %1684 = vmatpush1.msra.mxu0 0.0
    %1685 = vmatprep.subr.mxu0 0.0
    %1686 = vmatpush1.msra.mxu0 0.0
    %1687 = vmatprep.subr.mxu0 0.0
    %1688 = vmatpush1.msra.mxu0 0.0
    %1689 = vmatprep.subr.mxu0 0.0
    %1690 = vmatpush1.msra.mxu0 0.0
    %1691 = vmatprep.mubr.f32.mxu0 0.0
    %1692 = vmatmul.mubr.f32.gmra.mrb[0].mxu0 %v1604
    %v1693 = vpop.f32.mrb[0].mxu0
    %v1694 = vadd.f32 %v1600, %v1693
    %v1695 = vpop.f32.mrb[0].mxu0
    %1696 = vmatprep.mubr.f32.mxu0 0.0
    %1697 = vmatmul.mubr.f32.gmra.mrb[0].mxu0 %v1607
    %v1698 = vpop.f32.mrb[0].mxu0
    %v1699 = vadd.f32 %v1600, %v1698
    %v1700 = vpop.f32.mrb[0].mxu0
    %1701 = vmatprep.mubr.f32.mxu0 0.0
    %1702 = vmatmul.mubr.f32.gmra.mrb[0].mxu0 %v1610
    %v1703 = vpop.f32.mrb[0].mxu0
    %v1704 = vadd.f32 %v1600, %v1703
    %v1705 = vpop.f32.mrb[0].mxu0
    %1706 = vmatprep.mubr.f32.mxu0 0.0
    %1707 = vmatmul.mubr.f32.gmra.mrb[0].mxu0 %v1613
    %v1708 = vpop.f32.mrb[0].mxu0
    %v1709 = vadd.f32 %v1600, %v1708
    %v1710 = vpop.f32.mrb[0].mxu0
    %1711 = vmatprep.mubr.f32.mxu0 0.0
    %1712 = vmatmul.mubr.f32.gmra.mrb[0].mxu0 %v1616
    %v1713 = vpop.f32.mrb[0].mxu0
    %v1714 = vadd.f32 %v1600, %v1713
    %v1715 = vpop.f32.mrb[0].mxu0
    %1716 = vmatprep.mubr.f32.mxu0 0.0
    %1717 = vmatmul.mubr.f32.gmra.mrb[0].mxu0 %v1619
    %v1718 = vpop.f32.mrb[0].mxu0
    %v1719 = vadd.f32 %v1600, %v1718
    %v1720 = vpop.f32.mrb[0].mxu0
    %1721 = vmatprep.mubr.f32.mxu0 0.0
    %1722 = vmatmul.mubr.f32.gmra.mrb[0].mxu0 %v1622
    %v1723 = vpop.f32.mrb[0].mxu0
    %v1724 = vadd.f32 %v1600, %v1723
    %v1725 = vpop.f32.mrb[0].mxu0
    %1726 = vmatprep.mubr.f32.mxu0 0.0
    %1727 = vmatmul.mubr.f32.gmra.mrb[0].mxu0 %v1625
    %v1728 = vpop.f32.mrb[0].mxu0
    %v1729 = vadd.f32 %v1600, %v1728
    %v1730 = vpop.f32.mrb[0].mxu0
    %1731 = vdwg.mxu0
    %v1732 = vld [vmem:[%s5] sm:$0xff]
    %v1733 = vld [vmem:[%s5 + $0x8] sm:$0xff]
    %v1734 = vld [vmem:[%s5 + $0x10] sm:$0xff]
    %v1735 = vld [vmem:[%s5 + $0x18] sm:$0xff]
    %v1736 = vld [vmem:[%s6] sm:$0x1]
    %v1738 = vlaneseq
    %v1739 = vshrl.u32 %v1738, 7
    %v1740 = vsub.s32 0, %v1739
    %v1741 = vrot.slane %v1736, %v1740
    %vm1743 = vcmask 261120
    %v1745 = vsel %vm1743, 0.0, 0
    %1747 = vmatprep.subr.mxu0 0.0
    %1748 = vmatpush1.msra.mxu0 %v1732
    %1749 = vmatprep.subr.mxu0 0.0
    %1750 = vmatpush1.msra.mxu0 %v1733
    %1751 = vmatprep.subr.mxu0 0.0
    %1752 = vmatpush1.msra.mxu0 %v1734
    %1753 = vmatprep.subr.mxu0 0.0
    %1754 = vmatpush1.msra.mxu0 %v1735
    %1755 = vmatprep.subr.mxu0 0.0
    %1756 = vmatpush1.msra.mxu0 0.0
    %1757 = vmatprep.subr.mxu0 0.0
    %1758 = vmatpush1.msra.mxu0 0.0
    %1759 = vmatprep.subr.mxu0 0.0
    %1760 = vmatpush1.msra.mxu0 0.0
    %1761 = vmatprep.subr.mxu0 0.0
    %1762 = vmatpush1.msra.mxu0 0.0
    %1763 = vmatprep.subr.mxu0 0.0
    %1764 = vmatpush1.msra.mxu0 0.0
    %1765 = vmatprep.subr.mxu0 0.0
    %1766 = vmatpush1.msra.mxu0 0.0
    %1767 = vmatprep.subr.mxu0 0.0
    %1768 = vmatpush1.msra.mxu0 0.0
    %1769 = vmatprep.subr.mxu0 0.0
    %1770 = vmatpush1.msra.mxu0 0.0
    %1771 = vmatprep.subr.mxu0 0.0
    %1772 = vmatpush1.msra.mxu0 0.0
    %1773 = vmatprep.subr.mxu0 0.0
    %1774 = vmatpush1.msra.mxu0 0.0
    %1775 = vmatprep.subr.mxu0 0.0
    %1776 = vmatpush1.msra.mxu0 0.0
    %1777 = vmatprep.subr.mxu0 0.0
    %1778 = vmatpush1.msra.mxu0 0.0
    %1779 = vmatprep.subr.mxu0 0.0
    %1780 = vmatpush1.msra.mxu0 0.0
    %1781 = vmatprep.subr.mxu0 0.0
    %1782 = vmatpush1.msra.mxu0 0.0
    %1783 = vmatprep.subr.mxu0 0.0
    %1784 = vmatpush1.msra.mxu0 0.0
    %1785 = vmatprep.subr.mxu0 0.0
    %1786 = vmatpush1.msra.mxu0 0.0
    %1787 = vmatprep.subr.mxu0 0.0
    %1788 = vmatpush1.msra.mxu0 0.0
    %1789 = vmatprep.subr.mxu0 0.0
    %1790 = vmatpush1.msra.mxu0 0.0
    %1791 = vmatprep.subr.mxu0 0.0
    %1792 = vmatpush1.msra.mxu0 0.0
    %1793 = vmatprep.subr.mxu0 0.0
    %1794 = vmatpush1.msra.mxu0 0.0
    %1795 = vmatprep.subr.mxu0 0.0
    %1796 = vmatpush1.msra.mxu0 0.0
    %1797 = vmatprep.subr.mxu0 0.0
    %1798 = vmatpush1.msra.mxu0 0.0
    %1799 = vmatprep.subr.mxu0 0.0
    %1800 = vmatpush1.msra.mxu0 0.0
    %1801 = vmatprep.subr.mxu0 0.0
    %1802 = vmatpush1.msra.mxu0 0.0
    %1803 = vmatprep.subr.mxu0 0.0
    %1804 = vmatpush1.msra.mxu0 0.0
    %1805 = vmatprep.subr.mxu0 0.0
    %1806 = vmatpush1.msra.mxu0 0.0
    %1807 = vmatprep.subr.mxu0 0.0
    %1808 = vmatpush1.msra.mxu0 0.0
    %1809 = vmatprep.subr.mxu0 0.0
    %1810 = vmatpush1.msra.mxu0 0.0
    %1811 = vmatprep.mubr.f32.mxu0 0.0
    %1812 = vmatmul.mubr.f32.gmra.mrb[0].mxu0 %v1745
    %v1813 = vpop.f32.mrb[0].mxu0
    %v1814 = vadd.f32 %v1741, %v1813
    %v1815 = vpop.f32.mrb[0].mxu0
    %1816 = vdwg.mxu0
    %v1817 = vadd.f32 %v1694, %v1814
    %v1818 = vxor.u32 %v1817, 2147483648
    %v1819 = vmul.f32 %v1818, 1.442695
    %v1820 = vpow.pop %v1819
    %v1821 = vadd.f32 %v1820, 1.0
    %v1822 = vrcp.pop %v1821
    %v1823 = vmul.f32 1.0, %v1822
    %1825 = vrot.lane.b32.xlu0 %v1814, 64
    %v1826 = vpop.permute.xlu0 %1825
    %v1828 = vmul.f32 %v1823, %v1826
    %1830 = vrot.lane.b32.xlu0 %v1828, 64
    %v1831 = vpop.permute.xlu0 %1830
    %v1833 = vadd.f32 %v1694, %v1831
    %v1834 = vtanh.pop %v1833
    %v1835 = vsub.f32 1.0, %v1823
    %1837 = vrot.lane.b32.xlu0 %v1834, 96
    %v1838 = vpop.permute.xlu0 %1837
    %v1840 = vmul.f32 %v1835, %v1838
    %v1841 = vmul.f32 %v1823, 0.0
    %v1842 = vadd.f32 %v1840, %v1841
    %v1843 = vadd.f32 %v1842, 0.0
    %1845 = vrot.lane.b32.xlu0 %v1842, 96
    %v1846 = vpop.permute.xlu0 %1845
    %v1847 = vsel %vm1743, %v1846, 0
    %1849 = vmatprep.subr.mxu0 0.0
    %1850 = vmatpush1.msra.mxu0 %v1732
    %1851 = vmatprep.subr.mxu0 0.0
    %1852 = vmatpush1.msra.mxu0 %v1733
    %1853 = vmatprep.subr.mxu0 0.0
    %1854 = vmatpush1.msra.mxu0 %v1734
    %1855 = vmatprep.subr.mxu0 0.0
    %1856 = vmatpush1.msra.mxu0 %v1735
    %1857 = vmatprep.subr.mxu0 0.0
    %1858 = vmatpush1.msra.mxu0 0.0
    %1859 = vmatprep.subr.mxu0 0.0
    %1860 = vmatpush1.msra.mxu0 0.0
    %1861 = vmatprep.subr.mxu0 0.0
    %1862 = vmatpush1.msra.mxu0 0.0
    %1863 = vmatprep.subr.mxu0 0.0
    %1864 = vmatpush1.msra.mxu0 0.0
    %1865 = vmatprep.subr.mxu0 0.0
    %1866 = vmatpush1.msra.mxu0 0.0
    %1867 = vmatprep.subr.mxu0 0.0
    %1868 = vmatpush1.msra.mxu0 0.0
    %1869 = vmatprep.subr.mxu0 0.0
    %1870 = vmatpush1.msra.mxu0 0.0
    %1871 = vmatprep.subr.mxu0 0.0
    %1872 = vmatpush1.msra.mxu0 0.0
    %1873 = vmatprep.subr.mxu0 0.0
    %1874 = vmatpush1.msra.mxu0 0.0
    %1875 = vmatprep.subr.mxu0 0.0
    %1876 = vmatpush1.msra.mxu0 0.0
    %1877 = vmatprep.subr.mxu0 0.0
    %1878 = vmatpush1.msra.mxu0 0.0
    %1879 = vmatprep.subr.mxu0 0.0
    %1880 = vmatpush1.msra.mxu0 0.0
    %1881 = vmatprep.subr.mxu0 0.0
    %1882 = vmatpush1.msra.mxu0 0.0
    %1883 = vmatprep.subr.mxu0 0.0
    %1884 = vmatpush1.msra.mxu0 0.0
    %1885 = vmatprep.subr.mxu0 0.0
    %1886 = vmatpush1.msra.mxu0 0.0
    %1887 = vmatprep.subr.mxu0 0.0
    %1888 = vmatpush1.msra.mxu0 0.0
    %1889 = vmatprep.subr.mxu0 0.0
    %1890 = vmatpush1.msra.mxu0 0.0
    %1891 = vmatprep.subr.mxu0 0.0
    %1892 = vmatpush1.msra.mxu0 0.0
    %1893 = vmatprep.subr.mxu0 0.0
    %1894 = vmatpush1.msra.mxu0 0.0
    %1895 = vmatprep.subr.mxu0 0.0
    %1896 = vmatpush1.msra.mxu0 0.0
    %1897 = vmatprep.subr.mxu0 0.0
    %1898 = vmatpush1.msra.mxu0 0.0
    %1899 = vmatprep.subr.mxu0 0.0
    %1900 = vmatpush1.msra.mxu0 0.0
    %1901 = vmatprep.subr.mxu0 0.0
    %1902 = vmatpush1.msra.mxu0 0.0
    %1903 = vmatprep.subr.mxu0 0.0
    %1904 = vmatpush1.msra.mxu0 0.0
    %1905 = vmatprep.subr.mxu0 0.0
    %1906 = vmatpush1.msra.mxu0 0.0
    %1907 = vmatprep.subr.mxu0 0.0
    %1908 = vmatpush1.msra.mxu0 0.0
    %1909 = vmatprep.subr.mxu0 0.0
    %1910 = vmatpush1.msra.mxu0 0.0
    %1911 = vmatprep.subr.mxu0 0.0
    %1912 = vmatpush1.msra.mxu0 0.0
    %1913 = vmatprep.mubr.f32.mxu0 0.0
    %1914 = vmatmul.mubr.f32.gmra.mrb[0].mxu0 %v1847
    %v1915 = vpop.f32.mrb[0].mxu0
    %v1916 = vadd.f32 %v1741, %v1915
    %v1917 = vpop.f32.mrb[0].mxu0
    %1918 = vdwg.mxu0
    %v1919 = vadd.f32 %v1699, %v1916
    %v1920 = vxor.u32 %v1919, 2147483648
    %v1921 = vmul.f32 %v1920, 1.442695
    %v1922 = vpow.pop %v1921
    %v1923 = vadd.f32 %v1922, 1.0
    %v1924 = vrcp.pop %v1923
    %v1925 = vmul.f32 1.0, %v1924
    %1927 = vrot.lane.b32.xlu0 %v1916, 64
    %v1928 = vpop.permute.xlu0 %1927
    %v1930 = vmul.f32 %v1925, %v1928
    %1932 = vrot.lane.b32.xlu0 %v1930, 64
    %v1933 = vpop.permute.xlu0 %1932
    %v1935 = vadd.f32 %v1699, %v1933
    %v1936 = vtanh.pop %v1935
    %v1937 = vsub.f32 1.0, %v1925
    %1939 = vrot.lane.b32.xlu0 %v1936, 96
    %v1940 = vpop.permute.xlu0 %1939
    %v1942 = vmul.f32 %v1937, %v1940
    %v1943 = vmul.f32 %v1925, %v1842
    %v1944 = vadd.f32 %v1942, %v1943
    %v1945 = vadd.f32 %v1843, %v1944
    %1947 = vrot.lane.b32.xlu0 %v1944, 96
    %v1948 = vpop.permute.xlu0 %1947
    %v1949 = vsel %vm1743, %v1948, 0
    %1951 = vmatprep.subr.mxu0 0.0
    %1952 = vmatpush1.msra.mxu0 %v1732
    %1953 = vmatprep.subr.mxu0 0.0
    %1954 = vmatpush1.msra.mxu0 %v1733
    %1955 = vmatprep.subr.mxu0 0.0
    %1956 = vmatpush1.msra.mxu0 %v1734
    %1957 = vmatprep.subr.mxu0 0.0
    %1958 = vmatpush1.msra.mxu0 %v1735
    %1959 = vmatprep.subr.mxu0 0.0
    %1960 = vmatpush1.msra.mxu0 0.0
    %1961 = vmatprep.subr.mxu0 0.0
    %1962 = vmatpush1.msra.mxu0 0.0
    %1963 = vmatprep.subr.mxu0 0.0
    %1964 = vmatpush1.msra.mxu0 0.0
    %1965 = vmatprep.subr.mxu0 0.0
    %1966 = vmatpush1.msra.mxu0 0.0
    %1967 = vmatprep.subr.mxu0 0.0
    %1968 = vmatpush1.msra.mxu0 0.0
    %1969 = vmatprep.subr.mxu0 0.0
    %1970 = vmatpush1.msra.mxu0 0.0
    %1971 = vmatprep.subr.mxu0 0.0
    %1972 = vmatpush1.msra.mxu0 0.0
    %1973 = vmatprep.subr.mxu0 0.0
    %1974 = vmatpush1.msra.mxu0 0.0
    %1975 = vmatprep.subr.mxu0 0.0
    %1976 = vmatpush1.msra.mxu0 0.0
    %1977 = vmatprep.subr.mxu0 0.0
    %1978 = vmatpush1.msra.mxu0 0.0
    %1979 = vmatprep.subr.mxu0 0.0
    %1980 = vmatpush1.msra.mxu0 0.0
    %1981 = vmatprep.subr.mxu0 0.0
    %1982 = vmatpush1.msra.mxu0 0.0
    %1983 = vmatprep.subr.mxu0 0.0
    %1984 = vmatpush1.msra.mxu0 0.0
    %1985 = vmatprep.subr.mxu0 0.0
    %1986 = vmatpush1.msra.mxu0 0.0
    %1987 = vmatprep.subr.mxu0 0.0
    %1988 = vmatpush1.msra.mxu0 0.0
    %1989 = vmatprep.subr.mxu0 0.0
    %1990 = vmatpush1.msra.mxu0 0.0
    %1991 = vmatprep.subr.mxu0 0.0
    %1992 = vmatpush1.msra.mxu0 0.0
    %1993 = vmatprep.subr.mxu0 0.0
    %1994 = vmatpush1.msra.mxu0 0.0
    %1995 = vmatprep.subr.mxu0 0.0
    %1996 = vmatpush1.msra.mxu0 0.0
    %1997 = vmatprep.subr.mxu0 0.0
    %1998 = vmatpush1.msra.mxu0 0.0
    %1999 = vmatprep.subr.mxu0 0.0
    %2000 = vmatpush1.msra.mxu0 0.0
    %2001 = vmatprep.subr.mxu0 0.0
    %2002 = vmatpush1.msra.mxu0 0.0
    %2003 = vmatprep.subr.mxu0 0.0
    %2004 = vmatpush1.msra.mxu0 0.0
    %2005 = vmatprep.subr.mxu0 0.0
    %2006 = vmatpush1.msra.mxu0 0.0
    %2007 = vmatprep.subr.mxu0 0.0
    %2008 = vmatpush1.msra.mxu0 0.0
    %2009 = vmatprep.subr.mxu0 0.0
    %2010 = vmatpush1.msra.mxu0 0.0
    %2011 = vmatprep.subr.mxu0 0.0
    %2012 = vmatpush1.msra.mxu0 0.0
    %2013 = vmatprep.subr.mxu0 0.0
    %2014 = vmatpush1.msra.mxu0 0.0
    %2015 = vmatprep.mubr.f32.mxu0 0.0
    %2016 = vmatmul.mubr.f32.gmra.mrb[0].mxu0 %v1949
    %v2017 = vpop.f32.mrb[0].mxu0
    %v2018 = vadd.f32 %v1741, %v2017
    %v2019 = vpop.f32.mrb[0].mxu0
    %2020 = vdwg.mxu0
    %v2021 = vadd.f32 %v1704, %v2018
    %v2022 = vxor.u32 %v2021, 2147483648
    %v2023 = vmul.f32 %v2022, 1.442695
    %v2024 = vpow.pop %v2023
    %v2025 = vadd.f32 %v2024, 1.0
    %v2026 = vrcp.pop %v2025
    %v2027 = vmul.f32 1.0, %v2026
    %2029 = vrot.lane.b32.xlu0 %v2018, 64
    %v2030 = vpop.permute.xlu0 %2029
    %v2032 = vmul.f32 %v2027, %v2030
    %2034 = vrot.lane.b32.xlu0 %v2032, 64
    %v2035 = vpop.permute.xlu0 %2034
    %v2037 = vadd.f32 %v1704, %v2035
    %v2038 = vtanh.pop %v2037
    %v2039 = vsub.f32 1.0, %v2027
    %2041 = vrot.lane.b32.xlu0 %v2038, 96
    %v2042 = vpop.permute.xlu0 %2041
    %v2044 = vmul.f32 %v2039, %v2042
    %v2045 = vmul.f32 %v2027, %v1944
    %v2046 = vadd.f32 %v2044, %v2045
    %v2047 = vadd.f32 %v1945, %v2046
    %2049 = vrot.lane.b32.xlu0 %v2046, 96
    %v2050 = vpop.permute.xlu0 %2049
    %v2051 = vsel %vm1743, %v2050, 0
    %2053 = vmatprep.subr.mxu0 0.0
    %2054 = vmatpush1.msra.mxu0 %v1732
    %2055 = vmatprep.subr.mxu0 0.0
    %2056 = vmatpush1.msra.mxu0 %v1733
    %2057 = vmatprep.subr.mxu0 0.0
    %2058 = vmatpush1.msra.mxu0 %v1734
    %2059 = vmatprep.subr.mxu0 0.0
    %2060 = vmatpush1.msra.mxu0 %v1735
    %2061 = vmatprep.subr.mxu0 0.0
    %2062 = vmatpush1.msra.mxu0 0.0
    %2063 = vmatprep.subr.mxu0 0.0
    %2064 = vmatpush1.msra.mxu0 0.0
    %2065 = vmatprep.subr.mxu0 0.0
    %2066 = vmatpush1.msra.mxu0 0.0
    %2067 = vmatprep.subr.mxu0 0.0
    %2068 = vmatpush1.msra.mxu0 0.0
    %2069 = vmatprep.subr.mxu0 0.0
    %2070 = vmatpush1.msra.mxu0 0.0
    %2071 = vmatprep.subr.mxu0 0.0
    %2072 = vmatpush1.msra.mxu0 0.0
    %2073 = vmatprep.subr.mxu0 0.0
    %2074 = vmatpush1.msra.mxu0 0.0
    %2075 = vmatprep.subr.mxu0 0.0
    %2076 = vmatpush1.msra.mxu0 0.0
    %2077 = vmatprep.subr.mxu0 0.0
    %2078 = vmatpush1.msra.mxu0 0.0
    %2079 = vmatprep.subr.mxu0 0.0
    %2080 = vmatpush1.msra.mxu0 0.0
    %2081 = vmatprep.subr.mxu0 0.0
    %2082 = vmatpush1.msra.mxu0 0.0
    %2083 = vmatprep.subr.mxu0 0.0
    %2084 = vmatpush1.msra.mxu0 0.0
    %2085 = vmatprep.subr.mxu0 0.0
    %2086 = vmatpush1.msra.mxu0 0.0
    %2087 = vmatprep.subr.mxu0 0.0
    %2088 = vmatpush1.msra.mxu0 0.0
    %2089 = vmatprep.subr.mxu0 0.0
    %2090 = vmatpush1.msra.mxu0 0.0
    %2091 = vmatprep.subr.mxu0 0.0
    %2092 = vmatpush1.msra.mxu0 0.0
    %2093 = vmatprep.subr.mxu0 0.0
    %2094 = vmatpush1.msra.mxu0 0.0
    %2095 = vmatprep.subr.mxu0 0.0
    %2096 = vmatpush1.msra.mxu0 0.0
    %2097 = vmatprep.subr.mxu0 0.0
    %2098 = vmatpush1.msra.mxu0 0.0
    %2099 = vmatprep.subr.mxu0 0.0
    %2100 = vmatpush1.msra.mxu0 0.0
    %2101 = vmatprep.subr.mxu0 0.0
    %2102 = vmatpush1.msra.mxu0 0.0
    %2103 = vmatprep.subr.mxu0 0.0
    %2104 = vmatpush1.msra.mxu0 0.0
    %2105 = vmatprep.subr.mxu0 0.0
    %2106 = vmatpush1.msra.mxu0 0.0
    %2107 = vmatprep.subr.mxu0 0.0
    %2108 = vmatpush1.msra.mxu0 0.0
    %2109 = vmatprep.subr.mxu0 0.0
    %2110 = vmatpush1.msra.mxu0 0.0
    %2111 = vmatprep.subr.mxu0 0.0
    %2112 = vmatpush1.msra.mxu0 0.0
    %2113 = vmatprep.subr.mxu0 0.0
    %2114 = vmatpush1.msra.mxu0 0.0
    %2115 = vmatprep.subr.mxu0 0.0
    %2116 = vmatpush1.msra.mxu0 0.0
    %2117 = vmatprep.mubr.f32.mxu0 0.0
    %2118 = vmatmul.mubr.f32.gmra.mrb[0].mxu0 %v2051
    %v2119 = vpop.f32.mrb[0].mxu0
    %v2120 = vadd.f32 %v1741, %v2119
    %v2121 = vpop.f32.mrb[0].mxu0
    %2122 = vdwg.mxu0
    %v2123 = vadd.f32 %v1709, %v2120
    %v2124 = vxor.u32 %v2123, 2147483648
    %v2125 = vmul.f32 %v2124, 1.442695
    %v2126 = vpow.pop %v2125
    %v2127 = vadd.f32 %v2126, 1.0
    %v2128 = vrcp.pop %v2127
    %v2129 = vmul.f32 1.0, %v2128
    %2131 = vrot.lane.b32.xlu0 %v2120, 64
    %v2132 = vpop.permute.xlu0 %2131
    %v2134 = vmul.f32 %v2129, %v2132
    %2136 = vrot.lane.b32.xlu0 %v2134, 64
    %v2137 = vpop.permute.xlu0 %2136
    %v2139 = vadd.f32 %v1709, %v2137
    %v2140 = vtanh.pop %v2139
    %v2141 = vsub.f32 1.0, %v2129
    %2143 = vrot.lane.b32.xlu0 %v2140, 96
    %v2144 = vpop.permute.xlu0 %2143
    %v2146 = vmul.f32 %v2141, %v2144
    %v2147 = vmul.f32 %v2129, %v2046
    %v2148 = vadd.f32 %v2146, %v2147
    %v2149 = vadd.f32 %v2047, %v2148
    %2151 = vrot.lane.b32.xlu0 %v2148, 96
    %v2152 = vpop.permute.xlu0 %2151
    %v2153 = vsel %vm1743, %v2152, 0
    %2155 = vmatprep.subr.mxu0 0.0
    %2156 = vmatpush1.msra.mxu0 %v1732
    %2157 = vmatprep.subr.mxu0 0.0
    %2158 = vmatpush1.msra.mxu0 %v1733
    %2159 = vmatprep.subr.mxu0 0.0
    %2160 = vmatpush1.msra.mxu0 %v1734
    %2161 = vmatprep.subr.mxu0 0.0
    %2162 = vmatpush1.msra.mxu0 %v1735
    %2163 = vmatprep.subr.mxu0 0.0
    %2164 = vmatpush1.msra.mxu0 0.0
    %2165 = vmatprep.subr.mxu0 0.0
    %2166 = vmatpush1.msra.mxu0 0.0
    %2167 = vmatprep.subr.mxu0 0.0
    %2168 = vmatpush1.msra.mxu0 0.0
    %2169 = vmatprep.subr.mxu0 0.0
    %2170 = vmatpush1.msra.mxu0 0.0
    %2171 = vmatprep.subr.mxu0 0.0
    %2172 = vmatpush1.msra.mxu0 0.0
    %2173 = vmatprep.subr.mxu0 0.0
    %2174 = vmatpush1.msra.mxu0 0.0
    %2175 = vmatprep.subr.mxu0 0.0
    %2176 = vmatpush1.msra.mxu0 0.0
    %2177 = vmatprep.subr.mxu0 0.0
    %2178 = vmatpush1.msra.mxu0 0.0
    %2179 = vmatprep.subr.mxu0 0.0
    %2180 = vmatpush1.msra.mxu0 0.0
    %2181 = vmatprep.subr.mxu0 0.0
    %2182 = vmatpush1.msra.mxu0 0.0
    %2183 = vmatprep.subr.mxu0 0.0
    %2184 = vmatpush1.msra.mxu0 0.0
    %2185 = vmatprep.subr.mxu0 0.0
    %2186 = vmatpush1.msra.mxu0 0.0
    %2187 = vmatprep.subr.mxu0 0.0
    %2188 = vmatpush1.msra.mxu0 0.0
    %2189 = vmatprep.subr.mxu0 0.0
    %2190 = vmatpush1.msra.mxu0 0.0
    %2191 = vmatprep.subr.mxu0 0.0
    %2192 = vmatpush1.msra.mxu0 0.0
    %2193 = vmatprep.subr.mxu0 0.0
    %2194 = vmatpush1.msra.mxu0 0.0
    %2195 = vmatprep.subr.mxu0 0.0
    %2196 = vmatpush1.msra.mxu0 0.0
    %2197 = vmatprep.subr.mxu0 0.0
    %2198 = vmatpush1.msra.mxu0 0.0
    %2199 = vmatprep.subr.mxu0 0.0
    %2200 = vmatpush1.msra.mxu0 0.0
    %2201 = vmatprep.subr.mxu0 0.0
    %2202 = vmatpush1.msra.mxu0 0.0
    %2203 = vmatprep.subr.mxu0 0.0
    %2204 = vmatpush1.msra.mxu0 0.0
    %2205 = vmatprep.subr.mxu0 0.0
    %2206 = vmatpush1.msra.mxu0 0.0
    %2207 = vmatprep.subr.mxu0 0.0
    %2208 = vmatpush1.msra.mxu0 0.0
    %2209 = vmatprep.subr.mxu0 0.0
    %2210 = vmatpush1.msra.mxu0 0.0
    %2211 = vmatprep.subr.mxu0 0.0
    %2212 = vmatpush1.msra.mxu0 0.0
    %2213 = vmatprep.subr.mxu0 0.0
    %2214 = vmatpush1.msra.mxu0 0.0
    %2215 = vmatprep.subr.mxu0 0.0
    %2216 = vmatpush1.msra.mxu0 0.0
    %2217 = vmatprep.subr.mxu0 0.0
    %2218 = vmatpush1.msra.mxu0 0.0
    %2219 = vmatprep.mubr.f32.mxu0 0.0
    %2220 = vmatmul.mubr.f32.gmra.mrb[0].mxu0 %v2153
    %v2221 = vpop.f32.mrb[0].mxu0
    %v2222 = vadd.f32 %v1741, %v2221
    %v2223 = vpop.f32.mrb[0].mxu0
    %2224 = vdwg.mxu0
    %v2225 = vadd.f32 %v1714, %v2222
    %v2226 = vxor.u32 %v2225, 2147483648
    %v2227 = vmul.f32 %v2226, 1.442695
    %v2228 = vpow.pop %v2227
    %v2229 = vadd.f32 %v2228, 1.0
    %v2230 = vrcp.pop %v2229
    %v2231 = vmul.f32 1.0, %v2230
    %2233 = vrot.lane.b32.xlu0 %v2222, 64
    %v2234 = vpop.permute.xlu0 %2233
    %v2236 = vmul.f32 %v2231, %v2234
    %2238 = vrot.lane.b32.xlu0 %v2236, 64
    %v2239 = vpop.permute.xlu0 %2238
    %v2241 = vadd.f32 %v1714, %v2239
    %v2242 = vtanh.pop %v2241
    %v2243 = vsub.f32 1.0, %v2231
    %2245 = vrot.lane.b32.xlu0 %v2242, 96
    %v2246 = vpop.permute.xlu0 %2245
    %v2248 = vmul.f32 %v2243, %v2246
    %v2249 = vmul.f32 %v2231, %v2148
    %v2250 = vadd.f32 %v2248, %v2249
    %v2251 = vadd.f32 %v2149, %v2250
    %2253 = vrot.lane.b32.xlu0 %v2250, 96
    %v2254 = vpop.permute.xlu0 %2253
    %v2255 = vsel %vm1743, %v2254, 0
    %2257 = vmatprep.subr.mxu0 0.0
    %2258 = vmatpush1.msra.mxu0 %v1732
    %2259 = vmatprep.subr.mxu0 0.0
    %2260 = vmatpush1.msra.mxu0 %v1733
    %2261 = vmatprep.subr.mxu0 0.0
    %2262 = vmatpush1.msra.mxu0 %v1734
    %2263 = vmatprep.subr.mxu0 0.0
    %2264 = vmatpush1.msra.mxu0 %v1735
    %2265 = vmatprep.subr.mxu0 0.0
    %2266 = vmatpush1.msra.mxu0 0.0
    %2267 = vmatprep.subr.mxu0 0.0
    %2268 = vmatpush1.msra.mxu0 0.0
    %2269 = vmatprep.subr.mxu0 0.0
    %2270 = vmatpush1.msra.mxu0 0.0
    %2271 = vmatprep.subr.mxu0 0.0
    %2272 = vmatpush1.msra.mxu0 0.0
    %2273 = vmatprep.subr.mxu0 0.0
    %2274 = vmatpush1.msra.mxu0 0.0
    %2275 = vmatprep.subr.mxu0 0.0
    %2276 = vmatpush1.msra.mxu0 0.0
    %2277 = vmatprep.subr.mxu0 0.0
    %2278 = vmatpush1.msra.mxu0 0.0
    %2279 = vmatprep.subr.mxu0 0.0
    %2280 = vmatpush1.msra.mxu0 0.0
    %2281 = vmatprep.subr.mxu0 0.0
    %2282 = vmatpush1.msra.mxu0 0.0
    %2283 = vmatprep.subr.mxu0 0.0
    %2284 = vmatpush1.msra.mxu0 0.0
    %2285 = vmatprep.subr.mxu0 0.0
    %2286 = vmatpush1.msra.mxu0 0.0
    %2287 = vmatprep.subr.mxu0 0.0
    %2288 = vmatpush1.msra.mxu0 0.0
    %2289 = vmatprep.subr.mxu0 0.0
    %2290 = vmatpush1.msra.mxu0 0.0
    %2291 = vmatprep.subr.mxu0 0.0
    %2292 = vmatpush1.msra.mxu0 0.0
    %2293 = vmatprep.subr.mxu0 0.0
    %2294 = vmatpush1.msra.mxu0 0.0
    %2295 = vmatprep.subr.mxu0 0.0
    %2296 = vmatpush1.msra.mxu0 0.0
    %2297 = vmatprep.subr.mxu0 0.0
    %2298 = vmatpush1.msra.mxu0 0.0
    %2299 = vmatprep.subr.mxu0 0.0
    %2300 = vmatpush1.msra.mxu0 0.0
    %2301 = vmatprep.subr.mxu0 0.0
    %2302 = vmatpush1.msra.mxu0 0.0
    %2303 = vmatprep.subr.mxu0 0.0
    %2304 = vmatpush1.msra.mxu0 0.0
    %2305 = vmatprep.subr.mxu0 0.0
    %2306 = vmatpush1.msra.mxu0 0.0
    %2307 = vmatprep.subr.mxu0 0.0
    %2308 = vmatpush1.msra.mxu0 0.0
    %2309 = vmatprep.subr.mxu0 0.0
    %2310 = vmatpush1.msra.mxu0 0.0
    %2311 = vmatprep.subr.mxu0 0.0
    %2312 = vmatpush1.msra.mxu0 0.0
    %2313 = vmatprep.subr.mxu0 0.0
    %2314 = vmatpush1.msra.mxu0 0.0
    %2315 = vmatprep.subr.mxu0 0.0
    %2316 = vmatpush1.msra.mxu0 0.0
    %2317 = vmatprep.subr.mxu0 0.0
    %2318 = vmatpush1.msra.mxu0 0.0
    %2319 = vmatprep.subr.mxu0 0.0
    %2320 = vmatpush1.msra.mxu0 0.0
    %2321 = vmatprep.mubr.f32.mxu0 0.0
    %2322 = vmatmul.mubr.f32.gmra.mrb[0].mxu0 %v2255
    %v2323 = vpop.f32.mrb[0].mxu0
    %v2324 = vadd.f32 %v1741, %v2323
    %v2325 = vpop.f32.mrb[0].mxu0
    %2326 = vdwg.mxu0
    %v2327 = vadd.f32 %v1719, %v2324
    %v2328 = vxor.u32 %v2327, 2147483648
    %v2329 = vmul.f32 %v2328, 1.442695
    %v2330 = vpow.pop %v2329
    %v2331 = vadd.f32 %v2330, 1.0
    %v2332 = vrcp.pop %v2331
    %v2333 = vmul.f32 1.0, %v2332
    %2335 = vrot.lane.b32.xlu0 %v2324, 64
    %v2336 = vpop.permute.xlu0 %2335
    %v2338 = vmul.f32 %v2333, %v2336
    %2340 = vrot.lane.b32.xlu0 %v2338, 64
    %v2341 = vpop.permute.xlu0 %2340
    %v2343 = vadd.f32 %v1719, %v2341
    %v2344 = vtanh.pop %v2343
    %v2345 = vsub.f32 1.0, %v2333
    %2347 = vrot.lane.b32.xlu0 %v2344, 96
    %v2348 = vpop.permute.xlu0 %2347
    %v2350 = vmul.f32 %v2345, %v2348
    %v2351 = vmul.f32 %v2333, %v2250
    %v2352 = vadd.f32 %v2350, %v2351
    %v2353 = vadd.f32 %v2251, %v2352
    %2355 = vrot.lane.b32.xlu0 %v2352, 96
    %v2356 = vpop.permute.xlu0 %2355
    %v2357 = vsel %vm1743, %v2356, 0
    %2359 = vmatprep.subr.mxu0 0.0
    %2360 = vmatpush1.msra.mxu0 %v1732
    %2361 = vmatprep.subr.mxu0 0.0
    %2362 = vmatpush1.msra.mxu0 %v1733
    %2363 = vmatprep.subr.mxu0 0.0
    %2364 = vmatpush1.msra.mxu0 %v1734
    %2365 = vmatprep.subr.mxu0 0.0
    %2366 = vmatpush1.msra.mxu0 %v1735
    %2367 = vmatprep.subr.mxu0 0.0
    %2368 = vmatpush1.msra.mxu0 0.0
    %2369 = vmatprep.subr.mxu0 0.0
    %2370 = vmatpush1.msra.mxu0 0.0
    %2371 = vmatprep.subr.mxu0 0.0
    %2372 = vmatpush1.msra.mxu0 0.0
    %2373 = vmatprep.subr.mxu0 0.0
    %2374 = vmatpush1.msra.mxu0 0.0
    %2375 = vmatprep.subr.mxu0 0.0
    %2376 = vmatpush1.msra.mxu0 0.0
    %2377 = vmatprep.subr.mxu0 0.0
    %2378 = vmatpush1.msra.mxu0 0.0
    %2379 = vmatprep.subr.mxu0 0.0
    %2380 = vmatpush1.msra.mxu0 0.0
    %2381 = vmatprep.subr.mxu0 0.0
    %2382 = vmatpush1.msra.mxu0 0.0
    %2383 = vmatprep.subr.mxu0 0.0
    %2384 = vmatpush1.msra.mxu0 0.0
    %2385 = vmatprep.subr.mxu0 0.0
    %2386 = vmatpush1.msra.mxu0 0.0
    %2387 = vmatprep.subr.mxu0 0.0
    %2388 = vmatpush1.msra.mxu0 0.0
    %2389 = vmatprep.subr.mxu0 0.0
    %2390 = vmatpush1.msra.mxu0 0.0
    %2391 = vmatprep.subr.mxu0 0.0
    %2392 = vmatpush1.msra.mxu0 0.0
    %2393 = vmatprep.subr.mxu0 0.0
    %2394 = vmatpush1.msra.mxu0 0.0
    %2395 = vmatprep.subr.mxu0 0.0
    %2396 = vmatpush1.msra.mxu0 0.0
    %2397 = vmatprep.subr.mxu0 0.0
    %2398 = vmatpush1.msra.mxu0 0.0
    %2399 = vmatprep.subr.mxu0 0.0
    %2400 = vmatpush1.msra.mxu0 0.0
    %2401 = vmatprep.subr.mxu0 0.0
    %2402 = vmatpush1.msra.mxu0 0.0
    %2403 = vmatprep.subr.mxu0 0.0
    %2404 = vmatpush1.msra.mxu0 0.0
    %2405 = vmatprep.subr.mxu0 0.0
    %2406 = vmatpush1.msra.mxu0 0.0
    %2407 = vmatprep.subr.mxu0 0.0
    %2408 = vmatpush1.msra.mxu0 0.0
    %2409 = vmatprep.subr.mxu0 0.0
    %2410 = vmatpush1.msra.mxu0 0.0
    %2411 = vmatprep.subr.mxu0 0.0
    %2412 = vmatpush1.msra.mxu0 0.0
    %2413 = vmatprep.subr.mxu0 0.0
    %2414 = vmatpush1.msra.mxu0 0.0
    %2415 = vmatprep.subr.mxu0 0.0
    %2416 = vmatpush1.msra.mxu0 0.0
    %2417 = vmatprep.subr.mxu0 0.0
    %2418 = vmatpush1.msra.mxu0 0.0
    %2419 = vmatprep.subr.mxu0 0.0
    %2420 = vmatpush1.msra.mxu0 0.0
    %2421 = vmatprep.subr.mxu0 0.0
    %2422 = vmatpush1.msra.mxu0 0.0
    %2423 = vmatprep.mubr.f32.mxu0 0.0
    %2424 = vmatmul.mubr.f32.gmra.mrb[0].mxu0 %v2357
    %v2425 = vpop.f32.mrb[0].mxu0
    %v2426 = vadd.f32 %v1741, %v2425
    %v2427 = vpop.f32.mrb[0].mxu0
    %2428 = vdwg.mxu0
    %v2429 = vadd.f32 %v1724, %v2426
    %v2430 = vxor.u32 %v2429, 2147483648
    %v2431 = vmul.f32 %v2430, 1.442695
    %v2432 = vpow.pop %v2431
    %v2433 = vadd.f32 %v2432, 1.0
    %v2434 = vrcp.pop %v2433
    %v2435 = vmul.f32 1.0, %v2434
    %2437 = vrot.lane.b32.xlu0 %v2426, 64
    %v2438 = vpop.permute.xlu0 %2437
    %v2440 = vmul.f32 %v2435, %v2438
    %2442 = vrot.lane.b32.xlu0 %v2440, 64
    %v2443 = vpop.permute.xlu0 %2442
    %v2445 = vadd.f32 %v1724, %v2443
    %v2446 = vtanh.pop %v2445
    %v2447 = vsub.f32 1.0, %v2435
    %2449 = vrot.lane.b32.xlu0 %v2446, 96
    %v2450 = vpop.permute.xlu0 %2449
    %v2452 = vmul.f32 %v2447, %v2450
    %v2453 = vmul.f32 %v2435, %v2352
    %v2454 = vadd.f32 %v2452, %v2453
    %v2455 = vadd.f32 %v2353, %v2454
    %2457 = vrot.lane.b32.xlu0 %v2454, 96
    %v2458 = vpop.permute.xlu0 %2457
    %v2459 = vsel %vm1743, %v2458, 0
    %2461 = vmatprep.subr.mxu0 0.0
    %2462 = vmatpush1.msra.mxu0 %v1732
    %2463 = vmatprep.subr.mxu0 0.0
    %2464 = vmatpush1.msra.mxu0 %v1733
    %2465 = vmatprep.subr.mxu0 0.0
    %2466 = vmatpush1.msra.mxu0 %v1734
    %2467 = vmatprep.subr.mxu0 0.0
    %2468 = vmatpush1.msra.mxu0 %v1735
    %2469 = vmatprep.subr.mxu0 0.0
    %2470 = vmatpush1.msra.mxu0 0.0
    %2471 = vmatprep.subr.mxu0 0.0
    %2472 = vmatpush1.msra.mxu0 0.0
    %2473 = vmatprep.subr.mxu0 0.0
    %2474 = vmatpush1.msra.mxu0 0.0
    %2475 = vmatprep.subr.mxu0 0.0
    %2476 = vmatpush1.msra.mxu0 0.0
    %2477 = vmatprep.subr.mxu0 0.0
    %2478 = vmatpush1.msra.mxu0 0.0
    %2479 = vmatprep.subr.mxu0 0.0
    %2480 = vmatpush1.msra.mxu0 0.0
    %2481 = vmatprep.subr.mxu0 0.0
    %2482 = vmatpush1.msra.mxu0 0.0
    %2483 = vmatprep.subr.mxu0 0.0
    %2484 = vmatpush1.msra.mxu0 0.0
    %2485 = vmatprep.subr.mxu0 0.0
    %2486 = vmatpush1.msra.mxu0 0.0
    %2487 = vmatprep.subr.mxu0 0.0
    %2488 = vmatpush1.msra.mxu0 0.0
    %2489 = vmatprep.subr.mxu0 0.0
    %2490 = vmatpush1.msra.mxu0 0.0
    %2491 = vmatprep.subr.mxu0 0.0
    %2492 = vmatpush1.msra.mxu0 0.0
    %2493 = vmatprep.subr.mxu0 0.0
    %2494 = vmatpush1.msra.mxu0 0.0
    %2495 = vmatprep.subr.mxu0 0.0
    %2496 = vmatpush1.msra.mxu0 0.0
    %2497 = vmatprep.subr.mxu0 0.0
    %2498 = vmatpush1.msra.mxu0 0.0
    %2499 = vmatprep.subr.mxu0 0.0
    %2500 = vmatpush1.msra.mxu0 0.0
    %2501 = vmatprep.subr.mxu0 0.0
    %2502 = vmatpush1.msra.mxu0 0.0
    %2503 = vmatprep.subr.mxu0 0.0
    %2504 = vmatpush1.msra.mxu0 0.0
    %2505 = vmatprep.subr.mxu0 0.0
    %2506 = vmatpush1.msra.mxu0 0.0
    %2507 = vmatprep.subr.mxu0 0.0
    %2508 = vmatpush1.msra.mxu0 0.0
    %2509 = vmatprep.subr.mxu0 0.0
    %2510 = vmatpush1.msra.mxu0 0.0
    %2511 = vmatprep.subr.mxu0 0.0
    %2512 = vmatpush1.msra.mxu0 0.0
    %2513 = vmatprep.subr.mxu0 0.0
    %2514 = vmatpush1.msra.mxu0 0.0
    %2515 = vmatprep.subr.mxu0 0.0
    %2516 = vmatpush1.msra.mxu0 0.0
    %2517 = vmatprep.subr.mxu0 0.0
    %2518 = vmatpush1.msra.mxu0 0.0
    %2519 = vmatprep.subr.mxu0 0.0
    %2520 = vmatpush1.msra.mxu0 0.0
    %2521 = vmatprep.subr.mxu0 0.0
    %2522 = vmatpush1.msra.mxu0 0.0
    %2523 = vmatprep.subr.mxu0 0.0
    %2524 = vmatpush1.msra.mxu0 0.0
    %2525 = vmatprep.mubr.f32.mxu0 0.0
    %2526 = vmatmul.mubr.f32.gmra.mrb[0].mxu0 %v2459
    %v2527 = vpop.f32.mrb[0].mxu0
    %v2528 = vadd.f32 %v1741, %v2527
    %v2529 = vpop.f32.mrb[0].mxu0
    %2530 = vdwg.mxu0
    %v2531 = vadd.f32 %v1729, %v2528
    %v2532 = vxor.u32 %v2531, 2147483648
    %v2533 = vmul.f32 %v2532, 1.442695
    %v2534 = vpow.pop %v2533
    %v2535 = vadd.f32 %v2534, 1.0
    %v2536 = vrcp.pop %v2535
    %v2537 = vmul.f32 1.0, %v2536
    %2539 = vrot.lane.b32.xlu0 %v2528, 64
    %v2540 = vpop.permute.xlu0 %2539
    %v2542 = vmul.f32 %v2537, %v2540
    %2544 = vrot.lane.b32.xlu0 %v2542, 64
    %v2545 = vpop.permute.xlu0 %2544
    %v2547 = vadd.f32 %v1729, %v2545
    %v2548 = vtanh.pop %v2547
    %v2549 = vsub.f32 1.0, %v2537
    %2551 = vrot.lane.b32.xlu0 %v2548, 96
    %v2552 = vpop.permute.xlu0 %2551
    %v2554 = vmul.f32 %v2549, %v2552
    %v2555 = vmul.f32 %v2537, %v2454
    %v2556 = vadd.f32 %v2554, %v2555
    %v2557 = vadd.f32 %v2455, %v2556
    %v2558 = vmul.f32 %v2557, 0.125
    %v2559 = vld [vmem:[%s7] sm:$0xff]
    %v2560 = vld [vmem:[%s7 + $0x8] sm:$0xff]
    %v2561 = vld [vmem:[%s7 + $0x10] sm:$0xff]
    %v2562 = vld [vmem:[%s7 + $0x18] sm:$0xff]
    %v2563 = vld [vmem:[%s8] sm:$0x1]
    %v2565 = vlaneseq
    %v2566 = vshrl.u32 %v2565, 7
    %v2567 = vsub.s32 0, %v2566
    %v2568 = vrot.slane %v2563, %v2567
    %2571 = vrot.lane.b32.xlu0 %v2558, 96
    %v2572 = vpop.permute.xlu0 %2571
    %v2573 = vsel %vm1743, %v2572, 0
    %2575 = vmatprep.subr.mxu0 0.0
    %2576 = vmatpush1.msra.mxu0 %v2559
    %2577 = vmatprep.subr.mxu0 0.0
    %2578 = vmatpush1.msra.mxu0 %v2560
    %2579 = vmatprep.subr.mxu0 0.0
    %2580 = vmatpush1.msra.mxu0 %v2561
    %2581 = vmatprep.subr.mxu0 0.0
    %2582 = vmatpush1.msra.mxu0 %v2562
    %2583 = vmatprep.subr.mxu0 0.0
    %2584 = vmatpush1.msra.mxu0 0.0
    %2585 = vmatprep.subr.mxu0 0.0
    %2586 = vmatpush1.msra.mxu0 0.0
    %2587 = vmatprep.subr.mxu0 0.0
    %2588 = vmatpush1.msra.mxu0 0.0
    %2589 = vmatprep.subr.mxu0 0.0
    %2590 = vmatpush1.msra.mxu0 0.0
    %2591 = vmatprep.subr.mxu0 0.0
    %2592 = vmatpush1.msra.mxu0 0.0
    %2593 = vmatprep.subr.mxu0 0.0
    %2594 = vmatpush1.msra.mxu0 0.0
    %2595 = vmatprep.subr.mxu0 0.0
    %2596 = vmatpush1.msra.mxu0 0.0
    %2597 = vmatprep.subr.mxu0 0.0
    %2598 = vmatpush1.msra.mxu0 0.0
    %2599 = vmatprep.subr.mxu0 0.0
    %2600 = vmatpush1.msra.mxu0 0.0
    %2601 = vmatprep.subr.mxu0 0.0
    %2602 = vmatpush1.msra.mxu0 0.0
    %2603 = vmatprep.subr.mxu0 0.0
    %2604 = vmatpush1.msra.mxu0 0.0
    %2605 = vmatprep.subr.mxu0 0.0
    %2606 = vmatpush1.msra.mxu0 0.0
    %2607 = vmatprep.subr.mxu0 0.0
    %2608 = vmatpush1.msra.mxu0 0.0
    %2609 = vmatprep.subr.mxu0 0.0
    %2610 = vmatpush1.msra.mxu0 0.0
    %2611 = vmatprep.subr.mxu0 0.0
    %2612 = vmatpush1.msra.mxu0 0.0
    %2613 = vmatprep.subr.mxu0 0.0
    %2614 = vmatpush1.msra.mxu0 0.0
    %2615 = vmatprep.subr.mxu0 0.0
    %2616 = vmatpush1.msra.mxu0 0.0
    %2617 = vmatprep.subr.mxu0 0.0
    %2618 = vmatpush1.msra.mxu0 0.0
    %2619 = vmatprep.subr.mxu0 0.0
    %2620 = vmatpush1.msra.mxu0 0.0
    %2621 = vmatprep.subr.mxu0 0.0
    %2622 = vmatpush1.msra.mxu0 0.0
    %2623 = vmatprep.subr.mxu0 0.0
    %2624 = vmatpush1.msra.mxu0 0.0
    %2625 = vmatprep.subr.mxu0 0.0
    %2626 = vmatpush1.msra.mxu0 0.0
    %2627 = vmatprep.subr.mxu0 0.0
    %2628 = vmatpush1.msra.mxu0 0.0
    %2629 = vmatprep.subr.mxu0 0.0
    %2630 = vmatpush1.msra.mxu0 0.0
    %2631 = vmatprep.subr.mxu0 0.0
    %2632 = vmatpush1.msra.mxu0 0.0
    %2633 = vmatprep.subr.mxu0 0.0
    %2634 = vmatpush1.msra.mxu0 0.0
    %2635 = vmatprep.subr.mxu0 0.0
    %2636 = vmatpush1.msra.mxu0 0.0
    %2637 = vmatprep.subr.mxu0 0.0
    %2638 = vmatpush1.msra.mxu0 0.0
    %2639 = vmatprep.mubr.f32.mxu0 0.0
    %2640 = vmatmul.mubr.f32.gmra.mrb[0].mxu0 %v2573
    %v2641 = vpop.f32.mrb[0].mxu0
    %v2642 = vadd.f32 %v2568, %v2641
    %v2643 = vpop.f32.mrb[0].mxu0
    %2644 = vdwg.mxu0
    %v2646 = vrot.slane %v2642, 2
    %v2648 = vadd.f32 %v2642, %v2646
    %v2649 = vrot.slane %v2642, 4
    %v2651 = vadd.f32 %v2648, %v2649
    %v2652 = vmul.f32 %v2651, 0.33333334
    %v2653 = vld [vmem:[%s9] sm:$0xff]
    %v2654 = vld [vmem:[%s9 + $0x8] sm:$0xff]
    %vm2655 = vcmask 130048
    %v2657 = vsel %vm2655, %v2652, 0
    %2659 = vmatprep.subr.mxu0 0.0
    %2660 = vmatpush1.msra.mxu0 %v2653
    %2661 = vmatprep.subr.mxu0 0.0
    %2662 = vmatpush1.msra.mxu0 %v2654
    %2663 = vmatprep.subr.mxu0 0.0
    %2664 = vmatpush1.msra.mxu0 0.0
    %2665 = vmatprep.subr.mxu0 0.0
    %2666 = vmatpush1.msra.mxu0 0.0
    %2667 = vmatprep.subr.mxu0 0.0
    %2668 = vmatpush1.msra.mxu0 0.0
    %2669 = vmatprep.subr.mxu0 0.0
    %2670 = vmatpush1.msra.mxu0 0.0
    %2671 = vmatprep.subr.mxu0 0.0
    %2672 = vmatpush1.msra.mxu0 0.0
    %2673 = vmatprep.subr.mxu0 0.0
    %2674 = vmatpush1.msra.mxu0 0.0
    %2675 = vmatprep.subr.mxu0 0.0
    %2676 = vmatpush1.msra.mxu0 0.0
    %2677 = vmatprep.subr.mxu0 0.0
    %2678 = vmatpush1.msra.mxu0 0.0
    %2679 = vmatprep.subr.mxu0 0.0
    %2680 = vmatpush1.msra.mxu0 0.0
    %2681 = vmatprep.subr.mxu0 0.0
    %2682 = vmatpush1.msra.mxu0 0.0
    %2683 = vmatprep.subr.mxu0 0.0
    %2684 = vmatpush1.msra.mxu0 0.0
    %2685 = vmatprep.subr.mxu0 0.0
    %2686 = vmatpush1.msra.mxu0 0.0
    %2687 = vmatprep.subr.mxu0 0.0
    %2688 = vmatpush1.msra.mxu0 0.0
    %2689 = vmatprep.subr.mxu0 0.0
    %2690 = vmatpush1.msra.mxu0 0.0
    %2691 = vmatprep.subr.mxu0 0.0
    %2692 = vmatpush1.msra.mxu0 0.0
    %2693 = vmatprep.subr.mxu0 0.0
    %2694 = vmatpush1.msra.mxu0 0.0
    %2695 = vmatprep.subr.mxu0 0.0
    %2696 = vmatpush1.msra.mxu0 0.0
    %2697 = vmatprep.subr.mxu0 0.0
    %2698 = vmatpush1.msra.mxu0 0.0
    %2699 = vmatprep.subr.mxu0 0.0
    %2700 = vmatpush1.msra.mxu0 0.0
    %2701 = vmatprep.subr.mxu0 0.0
    %2702 = vmatpush1.msra.mxu0 0.0
    %2703 = vmatprep.subr.mxu0 0.0
    %2704 = vmatpush1.msra.mxu0 0.0
    %2705 = vmatprep.subr.mxu0 0.0
    %2706 = vmatpush1.msra.mxu0 0.0
    %2707 = vmatprep.subr.mxu0 0.0
    %2708 = vmatpush1.msra.mxu0 0.0
    %2709 = vmatprep.subr.mxu0 0.0
    %2710 = vmatpush1.msra.mxu0 0.0
    %2711 = vmatprep.subr.mxu0 0.0
    %2712 = vmatpush1.msra.mxu0 0.0
    %2713 = vmatprep.subr.mxu0 0.0
    %2714 = vmatpush1.msra.mxu0 0.0
    %2715 = vmatprep.subr.mxu0 0.0
    %2716 = vmatpush1.msra.mxu0 0.0
    %2717 = vmatprep.subr.mxu0 0.0
    %2718 = vmatpush1.msra.mxu0 0.0
    %2719 = vmatprep.subr.mxu0 0.0
    %2720 = vmatpush1.msra.mxu0 0.0
    %2721 = vmatprep.subr.mxu0 0.0
    %2722 = vmatpush1.msra.mxu0 0.0
    %2723 = vmatprep.mubr.f32.mxu0 0.0
    %2724 = vmatmul.mubr.f32.gmra.mrb[0].mxu0 %v2657
    %v2725 = vpop.f32.mrb[0].mxu0
    %v2726 = vadd.f32 0.0, %v2725
    %v2727 = vpop.f32.mrb[0].mxu0
    %2728 = vdwg.mxu0
    %v2729 = vrot.slane %v2642, 6
    %v2730 = vsel %vm2655, %v2729, 0
    %2732 = vmatprep.subr.mxu0 0.0
    %2733 = vmatpush1.msra.mxu0 %v2653
    %2734 = vmatprep.subr.mxu0 0.0
    %2735 = vmatpush1.msra.mxu0 %v2654
    %2736 = vmatprep.subr.mxu0 0.0
    %2737 = vmatpush1.msra.mxu0 0.0
    %2738 = vmatprep.subr.mxu0 0.0
    %2739 = vmatpush1.msra.mxu0 0.0
    %2740 = vmatprep.subr.mxu0 0.0
    %2741 = vmatpush1.msra.mxu0 0.0
    %2742 = vmatprep.subr.mxu0 0.0
    %2743 = vmatpush1.msra.mxu0 0.0
    %2744 = vmatprep.subr.mxu0 0.0
    %2745 = vmatpush1.msra.mxu0 0.0
    %2746 = vmatprep.subr.mxu0 0.0
    %2747 = vmatpush1.msra.mxu0 0.0
    %2748 = vmatprep.subr.mxu0 0.0
    %2749 = vmatpush1.msra.mxu0 0.0
    %2750 = vmatprep.subr.mxu0 0.0
    %2751 = vmatpush1.msra.mxu0 0.0
    %2752 = vmatprep.subr.mxu0 0.0
    %2753 = vmatpush1.msra.mxu0 0.0
    %2754 = vmatprep.subr.mxu0 0.0
    %2755 = vmatpush1.msra.mxu0 0.0
    %2756 = vmatprep.subr.mxu0 0.0
    %2757 = vmatpush1.msra.mxu0 0.0
    %2758 = vmatprep.subr.mxu0 0.0
    %2759 = vmatpush1.msra.mxu0 0.0
    %2760 = vmatprep.subr.mxu0 0.0
    %2761 = vmatpush1.msra.mxu0 0.0
    %2762 = vmatprep.subr.mxu0 0.0
    %2763 = vmatpush1.msra.mxu0 0.0
    %2764 = vmatprep.subr.mxu0 0.0
    %2765 = vmatpush1.msra.mxu0 0.0
    %2766 = vmatprep.subr.mxu0 0.0
    %2767 = vmatpush1.msra.mxu0 0.0
    %2768 = vmatprep.subr.mxu0 0.0
    %2769 = vmatpush1.msra.mxu0 0.0
    %2770 = vmatprep.subr.mxu0 0.0
    %2771 = vmatpush1.msra.mxu0 0.0
    %2772 = vmatprep.subr.mxu0 0.0
    %2773 = vmatpush1.msra.mxu0 0.0
    %2774 = vmatprep.subr.mxu0 0.0
    %2775 = vmatpush1.msra.mxu0 0.0
    %2776 = vmatprep.subr.mxu0 0.0
    %2777 = vmatpush1.msra.mxu0 0.0
    %2778 = vmatprep.subr.mxu0 0.0
    %2779 = vmatpush1.msra.mxu0 0.0
    %2780 = vmatprep.subr.mxu0 0.0
    %2781 = vmatpush1.msra.mxu0 0.0
    %2782 = vmatprep.subr.mxu0 0.0
    %2783 = vmatpush1.msra.mxu0 0.0
    %2784 = vmatprep.subr.mxu0 0.0
    %2785 = vmatpush1.msra.mxu0 0.0
    %2786 = vmatprep.subr.mxu0 0.0
    %2787 = vmatpush1.msra.mxu0 0.0
    %2788 = vmatprep.subr.mxu0 0.0
    %2789 = vmatpush1.msra.mxu0 0.0
    %2790 = vmatprep.subr.mxu0 0.0
    %2791 = vmatpush1.msra.mxu0 0.0
    %2792 = vmatprep.subr.mxu0 0.0
    %2793 = vmatpush1.msra.mxu0 0.0
    %2794 = vmatprep.subr.mxu0 0.0
    %2795 = vmatpush1.msra.mxu0 0.0
    %2796 = vmatprep.mubr.f32.mxu0 0.0
    %2797 = vmatmul.mubr.f32.gmra.mrb[0].mxu0 %v2730
    %v2798 = vpop.f32.mrb[0].mxu0
    %v2799 = vadd.f32 0.0, %v2798
    %v2800 = vpop.f32.mrb[0].mxu0
    %2801 = vdwg.mxu0
    %s2802 = sld [smem:[#allocation2 + $0x24]]
    %s2803 = sld [smem:[#allocation2 + $0x25]]
    %v2805 = vmul.f32 %v2652, %v2729
    %vm2806 = vcmask 123904
    %v2807 = vsel %vm2806, %v2805, 0.0
    %2808 = vadd.xlane.f32.xlu0 %v2807
    %v2809 = vpop.xlane.xlu0 %2808
    %v2810 = vstv %s2802
    %v2811 = vmul.f32 %v2810, %v2809
    %v2812 = vmul.f32 %v2652, %v2726
    %v2813 = vsel %vm2806, %v2812, 0.0
    %2814 = vadd.xlane.f32.xlu0 %v2813
    %v2815 = vpop.xlane.xlu0 %2814
    %v2816 = vsub.f32 %v2811, %v2815
    %v2818 = vrot.slane %v2799, 2
    %v2820 = vmul.f32 %v2642, %v2818
    %vm2821 = vcmask 130054
    %v2822 = vsel %vm2821, %v2820, 0.0
    %2823 = vadd.xlane.f32.xlu0 %v2822
    %v2824 = vpop.xlane.xlu0 %2823
    %v2826 = vrot.slane %v2824, 6
    %v2828 = vsub.f32 %v2816, %v2826
    %v2829 = vstv %s2803
    %v2830 = vadd.f32 %v2828, %v2829
    %vm2831 = vcmask 1024
    %2832 = vst.msk [vmem:[%s10] sm:$0x3] %vm2831, %v2830
    // Predicated region
    $region46: #{speaker_verifier_forward.1} parent=1 // pred_check
      _
    $region47: #{speaker_verifier_forward.1} parent=1 // pred_check_branch
      %2834 = sbr.rel (0) target = $region49
    $region48: #{speaker_verifier_forward.1} parent=1 // pred_region
      _
    $region49: #{speaker_verifier_forward.1} parent=1 // pred_fallthru
      _
    // Predicated region
    $region50: #{speaker_verifier_forward.1} parent=1 // pred_check
      _
    $region51: #{speaker_verifier_forward.1} parent=1 // pred_check_branch
      %2836 = sbr.rel (0) target = $region53
    $region52: #{speaker_verifier_forward.1} parent=1 // pred_region
      _
    $region53: #{speaker_verifier_forward.1} parent=1 // pred_fallthru
      _
    %2837 = vsyncpa [#allocation3], 1

</llo_original>
